<compile_context>
chip_gen: v7x
topology: tpu7x:2x2x1
jax: 0.10.0
libtpu: 0.0.40
codegen_flags: <defaults>
</compile_context>

<pallas_src>
import jax
import jax.numpy as jnp
from jax.experimental import pallas as pl
from jax.experimental.pallas import tpu as pltpu

FC1_DIM = 1024
FC2_DIM = 128
SUBLANES = 16  # bf16 sublane packing (also a multiple of the f32 sublane 8)


def _round_up(x, m):
    return (x + m - 1) // m * m


def mlp_kernel(x_ref, w1_ref, b1_ref, w2_ref, b2_ref, w3_ref, b3_ref, o_ref):
    # fc1: bf16 operands on the MXU, f32 accumulation; bias + relu in f32
    h1 = jnp.dot(x_ref[...], w1_ref[...], preferred_element_type=jnp.float32)
    h1 = jnp.maximum(h1 + b1_ref[...], 0.0)
    # dropout(0.5) -> identity (eval mode)
    # fc2
    h2 = jnp.dot(h1.astype(jnp.bfloat16), w2_ref[...],
                 preferred_element_type=jnp.float32)
    h2 = jnp.maximum(h2 + b2_ref[...], 0.0)
    # dropout(0.5) -> identity (eval mode)
    # fc3 (class dim pre-padded to 128 lanes)
    out = jnp.dot(h2.astype(jnp.bfloat16), w3_ref[...],
                  preferred_element_type=jnp.float32)
    o_ref[...] = (out + b3_ref[...]).astype(o_ref.dtype)


def mlp_forward(x_nchw, params, num_classes, padded_classes, tile_m=256):
    """x_nchw: (B, C, H, W) float32.  Returns (B, num_classes) float32."""
    B = x_nchw.shape[0]
    x2d = x_nchw.reshape(B, -1)  # torch.flatten(x, 1)
    D = x2d.shape[1]

    w1, b1, w2, b2, w3p, b3p = params

    # sublane-aligned batch tile; pad B up to a multiple of the tile
    tile_m = min(tile_m, _round_up(B, SUBLANES))
    B_pad = _round_up(B, tile_m)
    if B_pad != B:
        x2d = jnp.pad(x2d, ((0, B_pad - B), (0, 0)))
    x_bf16 = x2d.astype(jnp.bfloat16)  # halve activation DMA bytes
    grid_m = B_pad // tile_m

    flops = 2 * B_pad * (D * FC1_DIM + FC1_DIM * FC2_DIM
                         + FC2_DIM * padded_classes)
    bytes_accessed = (
        x_bf16.size * 2
        + (w1.size + w2.size + w3p.size) * 2          # bf16 weights
        + (b1.size + b2.size + b3p.size) * 4          # f32 biases
        + B_pad * padded_classes * 4                  # f32 output
    )

    rep = lambda i: (0, 0)  # weights / biases resident across all batch tiles
    out_padded = pl.pallas_call(
        mlp_kernel,
        out_shape=jax.ShapeDtypeStruct((B_pad, padded_classes), jnp.float32),
        grid_spec=pltpu.PrefetchScalarGridSpec(
            num_scalar_prefetch=0,
            grid=(grid_m,),
            in_specs=[
                pl.BlockSpec((tile_m, D), lambda i: (i, 0)),       # x tile
                pl.BlockSpec((D, FC1_DIM), rep),                   # w1
                pl.BlockSpec((1, FC1_DIM), rep),                   # b1
                pl.BlockSpec((FC1_DIM, FC2_DIM), rep),             # w2
                pl.BlockSpec((1, FC2_DIM), rep),                   # b2
                pl.BlockSpec((FC2_DIM, padded_classes), rep),      # w3 (padded)
                pl.BlockSpec((1, padded_classes), rep),            # b3 (padded)
            ],
            out_specs=pl.BlockSpec((tile_m, padded_classes), lambda i: (i, 0)),
        ),
        compiler_params=pltpu.CompilerParams(
            dimension_semantics=("parallel",),
        ),
        cost_estimate=pl.CostEstimate(
            flops=flops, transcendentals=0, bytes_accessed=bytes_accessed),
    )(x_bf16, w1, b1, w2, b2, w3p, b3p)

    # glue: strip batch padding and the class-lane padding
    return out_padded[:B, :num_classes]


def init_params(key, input_dim, num_classes, padded_classes):
    """torch.nn.Linear-style init U(-1/sqrt(fan_in), 1/sqrt(fan_in)).
    Weights stored (in, out) as bf16 (streamed to MXU); biases kept f32."""
    ks = jax.random.split(key, 6)

    def lin(kw, kb, fan_in, fan_out):
        bound = 1.0 / jnp.sqrt(jnp.float32(fan_in))
        w = jax.random.uniform(kw, (fan_in, fan_out), jnp.float32, -bound, bound)
        b = jax.random.uniform(kb, (1, fan_out), jnp.float32, -bound, bound)
        return w, b

    w1, b1 = lin(ks[0], ks[1], input_dim, FC1_DIM)
    w2, b2 = lin(ks[2], ks[3], FC1_DIM, FC2_DIM)
    w3, b3 = lin(ks[4], ks[5], FC2_DIM, num_classes)

    # pad fc3 output dim to a lane-dense width (zeros, sliced off after kernel)
    pad = padded_classes - num_classes
    w3p = jnp.pad(w3, ((0, 0), (0, pad)))
    b3p = jnp.pad(b3, ((0, 0), (0, pad)))

    return (w1.astype(jnp.bfloat16), b1,
            w2.astype(jnp.bfloat16), b2,
            w3p.astype(jnp.bfloat16), b3p)


if __name__ == "__main__":
    # data_config analogue: input_dims = (1, 16, 16) -> input_dim = 256,
    # mapping of 10 classes -> num_classes = 10
    B, C, H, W = 2, 1, 16, 16
    input_dim = C * H * W
    num_classes = 10
    padded_classes = 128

    key = jax.random.PRNGKey(0)
    k_x, k_p = jax.random.split(key)

    x = jax.random.normal(k_x, (B, C, H, W), jnp.float32)
    params = init_params(k_p, input_dim, num_classes, padded_classes)

    out = mlp_forward(x, params, num_classes, padded_classes)
    out = jax.block_until_ready(out)

    # sanity: plain-JAX reference with the same bf16-operand / f32-accumulate math
    w1, b1, w2, b2, w3p, b3p = params
    x2d = x.reshape(B, -1).astype(jnp.bfloat16)
    h1 = jnp.maximum(
        jnp.dot(x2d, w1, preferred_element_type=jnp.float32) + b1, 0.0)
    h2 = jnp.maximum(
        jnp.dot(h1.astype(jnp.bfloat16), w2,
                preferred_element_type=jnp.float32) + b2, 0.0)
    ref = (jnp.dot(h2.astype(jnp.bfloat16), w3p,
                   preferred_element_type=jnp.float32) + b3p)[:, :num_classes]

    assert out.shape == (B, num_classes)
    assert jnp.allclose(out, ref, atol=2e-2, rtol=2e-2)

    print("KERNEL_OK")
</pallas_src>

<mosaic_0001>
module attributes {stable_mosaic.version = 11 : i64} {
  func.func @mlp_kernel(%arg0: i32, %arg1: memref<16x256xbf16, #tpu.memory_space<vmem>>, %arg2: memref<256x1024xbf16, #tpu.memory_space<vmem>>, %arg3: memref<1x1024xf32, #tpu.memory_space<vmem>>, %arg4: memref<1024x128xbf16, #tpu.memory_space<vmem>>, %arg5: memref<1x128xf32, #tpu.memory_space<vmem>>, %arg6: memref<128x128xbf16, #tpu.memory_space<vmem>>, %arg7: memref<1x128xf32, #tpu.memory_space<vmem>>, %arg8: memref<16x128xf32, #tpu.memory_space<vmem>>) attributes {dimension_semantics = [#tpu.dimension_semantics<parallel>], iteration_bounds = array<i64: 1>, scalar_prefetch = 0 : i64, scratch_operands = 0 : i64, tpu.core_type = #tpu.core_type<tc>, window_params = [{transform_indices = @transform_0, window_bounds = array<i64: 16, 256>}, {pipeline_mode = #tpu.pipeline_mode<synchronous>, transform_indices = @transform_1, window_bounds = array<i64: 256, 1024>}, {pipeline_mode = #tpu.pipeline_mode<synchronous>, transform_indices = @transform_2, window_bounds = array<i64: 1, 1024>}, {pipeline_mode = #tpu.pipeline_mode<synchronous>, transform_indices = @transform_3, window_bounds = array<i64: 1024, 128>}, {pipeline_mode = #tpu.pipeline_mode<synchronous>, transform_indices = @transform_4, window_bounds = array<i64: 1, 128>}, {pipeline_mode = #tpu.pipeline_mode<synchronous>, transform_indices = @transform_5, window_bounds = array<i64: 128, 128>}, {pipeline_mode = #tpu.pipeline_mode<synchronous>, transform_indices = @transform_6, window_bounds = array<i64: 1, 128>}, {transform_indices = @transform_7, window_bounds = array<i64: 16, 128>}]} {
    %c0 = arith.constant 0 : index
    %c0_0 = arith.constant 0 : index
    %0 = vector.load %arg1[%c0, %c0_0] : memref<16x256xbf16, #tpu.memory_space<vmem>>, vector<16x256xbf16>
    %c0_1 = arith.constant 0 : index
    %c0_2 = arith.constant 0 : index
    %1 = vector.load %arg2[%c0_1, %c0_2] : memref<256x1024xbf16, #tpu.memory_space<vmem>>, vector<256x1024xbf16>
    %cst = arith.constant dense<0.000000e+00> : vector<16x1024xf32>
    %2 = tpu.matmul %0, %1, %cst {dimension_numbers = #tpu.dot_dimension_numbers<[1], [0], [0], [1], [0, 0, 1, 1], [], []>} : vector<16x256xbf16>, vector<256x1024xbf16>, vector<16x1024xf32> -> vector<16x1024xf32>
    %c0_3 = arith.constant 0 : index
    %c0_4 = arith.constant 0 : index
    %3 = vector.load %arg3[%c0_3, %c0_4] : memref<1x1024xf32, #tpu.memory_space<vmem>>, vector<1x1024xf32>
    %4 = vector.broadcast %3 : vector<1x1024xf32> to vector<16x1024xf32>
    %5 = arith.addf %2, %4 : vector<16x1024xf32>
    %cst_5 = arith.constant 0.000000e+00 : f32
    %6 = vector.broadcast %cst_5 : f32 to vector<16x1024xf32>
    %7 = arith.maximumf %5, %6 : vector<16x1024xf32>
    %8 = arith.truncf %7 : vector<16x1024xf32> to vector<16x1024xbf16>
    %c0_6 = arith.constant 0 : index
    %c0_7 = arith.constant 0 : index
    %9 = vector.load %arg4[%c0_6, %c0_7] : memref<1024x128xbf16, #tpu.memory_space<vmem>>, vector<1024x128xbf16>
    %cst_8 = arith.constant dense<0.000000e+00> : vector<16x128xf32>
    %10 = tpu.matmul %8, %9, %cst_8 {dimension_numbers = #tpu.dot_dimension_numbers<[1], [0], [0], [1], [0, 0, 1, 1], [], []>} : vector<16x1024xbf16>, vector<1024x128xbf16>, vector<16x128xf32> -> vector<16x128xf32>
    %c0_9 = arith.constant 0 : index
    %c0_10 = arith.constant 0 : index
    %11 = vector.load %arg5[%c0_9, %c0_10] : memref<1x128xf32, #tpu.memory_space<vmem>>, vector<1x128xf32>
    %12 = vector.broadcast %11 : vector<1x128xf32> to vector<16x128xf32>
    %13 = arith.addf %10, %12 : vector<16x128xf32>
    %cst_11 = arith.constant 0.000000e+00 : f32
    %14 = vector.broadcast %cst_11 : f32 to vector<16x128xf32>
    %15 = arith.maximumf %13, %14 : vector<16x128xf32>
    %16 = arith.truncf %15 : vector<16x128xf32> to vector<16x128xbf16>
    %c0_12 = arith.constant 0 : index
    %c0_13 = arith.constant 0 : index
    %17 = vector.load %arg6[%c0_12, %c0_13] : memref<128x128xbf16, #tpu.memory_space<vmem>>, vector<128x128xbf16>
    %cst_14 = arith.constant dense<0.000000e+00> : vector<16x128xf32>
    %18 = tpu.matmul %16, %17, %cst_14 {dimension_numbers = #tpu.dot_dimension_numbers<[1], [0], [0], [1], [0, 0, 1, 1], [], []>} : vector<16x128xbf16>, vector<128x128xbf16>, vector<16x128xf32> -> vector<16x128xf32>
    %c0_15 = arith.constant 0 : index
    %c0_16 = arith.constant 0 : index
    %19 = vector.load %arg7[%c0_15, %c0_16] : memref<1x128xf32, #tpu.memory_space<vmem>>, vector<1x128xf32>
    %20 = vector.broadcast %19 : vector<1x128xf32> to vector<16x128xf32>
    %21 = arith.addf %18, %20 : vector<16x128xf32>
    %c0_17 = arith.constant 0 : index
    %c0_18 = arith.constant 0 : index
    %22 = vector.load %arg8[%c0_17, %c0_18] : memref<16x128xf32, #tpu.memory_space<vmem>>, vector<16x128xf32>
    tpu.vector_store %arg8[%c0_17, %c0_18], %21 {strides = array<i32>} : memref<16x128xf32, #tpu.memory_space<vmem>>, vector<16x128xf32>,
    return
  }
  func.func @transform_0(%arg0: i32) -> (i32, i32) {
    %c0_i32 = arith.constant 0 : i32
    %c0_i32_0 = arith.constant 0 : i32
    return %arg0, %c0_i32 : i32, i32
  }
  func.func @transform_1(%arg0: i32) -> (i32, i32) {
    %c0_i32 = arith.constant 0 : i32
    %c0_i32_0 = arith.constant 0 : i32
    %c0_i32_1 = arith.constant 0 : i32
    return %c0_i32, %c0_i32_0 : i32, i32
  }
  func.func @transform_2(%arg0: i32) -> (i32, i32) {
    %c0_i32 = arith.constant 0 : i32
    %c0_i32_0 = arith.constant 0 : i32
    %c0_i32_1 = arith.constant 0 : i32
    return %c0_i32, %c0_i32_0 : i32, i32
  }
  func.func @transform_3(%arg0: i32) -> (i32, i32) {
    %c0_i32 = arith.constant 0 : i32
    %c0_i32_0 = arith.constant 0 : i32
    %c0_i32_1 = arith.constant 0 : i32
    return %c0_i32, %c0_i32_0 : i32, i32
  }
  func.func @transform_4(%arg0: i32) -> (i32, i32) {
    %c0_i32 = arith.constant 0 : i32
    %c0_i32_0 = arith.constant 0 : i32
    %c0_i32_1 = arith.constant 0 : i32
    return %c0_i32, %c0_i32_0 : i32, i32
  }
  func.func @transform_5(%arg0: i32) -> (i32, i32) {
    %c0_i32 = arith.constant 0 : i32
    %c0_i32_0 = arith.constant 0 : i32
    %c0_i32_1 = arith.constant 0 : i32
    return %c0_i32, %c0_i32_0 : i32, i32
  }
  func.func @transform_6(%arg0: i32) -> (i32, i32) {
    %c0_i32 = arith.constant 0 : i32
    %c0_i32_0 = arith.constant 0 : i32
    %c0_i32_1 = arith.constant 0 : i32
    return %c0_i32, %c0_i32_0 : i32, i32
  }
  func.func @transform_7(%arg0: i32) -> (i32, i32) {
    %c0_i32 = arith.constant 0 : i32
    %c0_i32_0 = arith.constant 0 : i32
    return %arg0, %c0_i32 : i32, i32
  }
}

</mosaic_0001>

<llo_original>
// kernel: tpu_custom_call.1
$region0: #{tpu_custom_call.1}
  #allocation0 [shape = 'u32[]', space=smem, size = 0x4, offset = 0x4, fixed_abs, tag = 'smem constant byte address 0x4 - core index']
  #allocation1 [shape = 'u32[144,128]{1,0:T(1,128)}', space=vmem, size = 0x12000, scoped, tag = 'internal scratch']
  %s0 = inlined_call_operand.hbm [shape: bf16[16,256], index: 0, kind: input, shape index: {}]
  %s1 = inlined_call_operand.hbm [shape: bf16[256,1024], index: 1, kind: input, shape index: {}]
  %s2 = inlined_call_operand.hbm [shape: f32[1,1024], index: 2, kind: input, shape index: {}]
  %s3 = inlined_call_operand.hbm [shape: bf16[1024,128], index: 3, kind: input, shape index: {}]
  %s4 = inlined_call_operand.vmem [shape: f32[1,128], index: 4, kind: input, shape index: {}]
  %s5 = inlined_call_operand.hbm [shape: bf16[128,128], index: 5, kind: input, shape index: {}]
  %s6 = inlined_call_operand.vmem [shape: f32[1,128], index: 6, kind: input, shape index: {}]
  %s7 = inlined_call_operand.hbm [shape: f32[16,128], index: 7, kind: output, shape index: {}]
  %s8 = sld [smem:[#allocation0]]
  $region58: #{tpu_custom_call.1} parent=0
    _
  %s10 = ssub.s32 1, %s8
  %s11 = scalar_select 0, %s10, %s8
  $region1: #{tpu_custom_call.1} parent=0
    #allocation2 [shape = 'u8[8192]{0}', space=vmem, size = 0x2000, scoped, tag = 'input window, operand 0, single buffered']
    #allocation3 [shape = 's32[1]{0}', space=sflag, size = 0x4, scoped, tag = 'scoped memory for tpu_custom_call.1']
    #allocation4 [shape = 's32[1]{0}', space=sflag, size = 0x4, scoped, tag = 'scoped memory for tpu_custom_call.1']
    #allocation5 [shape = 'u8[524288]{0}', space=vmem, size = 0x80000, scoped, tag = 'input window, operand 1, single buffered']
    #allocation6 [shape = 's32[1]{0}', space=sflag, size = 0x4, scoped, tag = 'scoped memory for tpu_custom_call.1']
    #allocation7 [shape = 'u8[4096]{0}', space=vmem, size = 0x1000, scoped, tag = 'input window, operand 2, single buffered']
    #allocation8 [shape = 'u8[262144]{0}', space=vmem, size = 0x40000, scoped, tag = 'input window, operand 3, single buffered']
    #allocation9 [shape = 's32[1]{0}', space=sflag, size = 0x4, scoped, tag = 'scoped memory for tpu_custom_call.1']
    #allocation10 [shape = 'u8[32768]{0}', space=vmem, size = 0x8000, scoped, tag = 'input window, operand 5, single buffered']
    #allocation11 [shape = 'u8[8192]{0}', space=vmem, size = 0x2000, scoped, tag = 'output window, operand 0, single buffered']
    %12 = vsyncpa [#allocation3], 0
    %13 = vsyncpa [#allocation6], 0
    %14 = vsyncpa [#allocation9], 0
    %15 = vsyncpa [#allocation4], 0
    // Predicated region
    $region2: #{tpu_custom_call.1} parent=1 // pred_check
      _
    $region3: #{tpu_custom_call.1} parent=1 // pred_check_branch
      %17 = sbr.rel (0) target = $region5
    $region4: #{tpu_custom_call.1} parent=1 // pred_region
      %s19 = ssub.s32 256, 256
      %20 = vsyncadd [#allocation3], %s19
      %s21 = sshll.u32 [#allocation2], 4
      %s22 = int_to_ptr.vmem [resolvable:$true] %s21
      %27 = dma.hbm_to_vmem [thread:$0]  %s0, 256, %s22, [#allocation3], 128, 128, 8
    $region5: #{tpu_custom_call.1} parent=1 // pred_fallthru
      _
    // Predicated region
    $region6: #{tpu_custom_call.1} parent=1 // pred_check
      _
    $region7: #{tpu_custom_call.1} parent=1 // pred_check_branch
      %29 = sbr.rel (0) target = $region9
    $region8: #{tpu_custom_call.1} parent=1 // pred_region
      %s31 = ssub.s32 16384, 16384
      %32 = vsyncadd [#allocation6], %s31
      %s33 = sshll.u32 [#allocation5], 4
      %s34 = int_to_ptr.vmem [resolvable:$true] %s33
      %39 = dma.hbm_to_vmem [thread:$0]  %s1, 16384, %s34, [#allocation6], 512, 512, 32
    $region9: #{tpu_custom_call.1} parent=1 // pred_fallthru
      _
    // Predicated region
    $region10: #{tpu_custom_call.1} parent=1 // pred_check
      _
    $region11: #{tpu_custom_call.1} parent=1 // pred_check_branch
      %41 = sbr.rel (0) target = $region13
    $region12: #{tpu_custom_call.1} parent=1 // pred_region
      %s43 = ssub.s32 128, 128
      %44 = vsyncadd [#allocation6], %s43
      %s46 = sshll.u32 [#allocation7], 4
      %s47 = int_to_ptr.vmem [resolvable:$true] %s46
      %49 = dma.hbm_to_vmem [thread:$0]  %s2, 128, %s47, [#allocation6]
    $region13: #{tpu_custom_call.1} parent=1 // pred_fallthru
      _
    // Predicated region
    $region14: #{tpu_custom_call.1} parent=1 // pred_check
      _
    $region15: #{tpu_custom_call.1} parent=1 // pred_check_branch
      %51 = sbr.rel (0) target = $region17
    $region16: #{tpu_custom_call.1} parent=1 // pred_region
      %s53 = ssub.s32 8192, 8192
      %54 = vsyncadd [#allocation9], %s53
      %s55 = sshll.u32 [#allocation8], 4
      %s56 = int_to_ptr.vmem [resolvable:$true] %s55
      %61 = dma.hbm_to_vmem [thread:$0]  %s3, 8192, %s56, [#allocation9], 64, 64, 4
    $region17: #{tpu_custom_call.1} parent=1 // pred_fallthru
      _
    // Predicated region
    $region18: #{tpu_custom_call.1} parent=1 // pred_check
      _
    $region19: #{tpu_custom_call.1} parent=1 // pred_check_branch
      %63 = sbr.rel (0) target = $region21
    $region20: #{tpu_custom_call.1} parent=1 // pred_region
      _
    $region21: #{tpu_custom_call.1} parent=1 // pred_fallthru
      _
    // Predicated region
    $region22: #{tpu_custom_call.1} parent=1 // pred_check
      _
    $region23: #{tpu_custom_call.1} parent=1 // pred_check_branch
      %65 = sbr.rel (0) target = $region25
    $region24: #{tpu_custom_call.1} parent=1 // pred_region
      %s67 = ssub.s32 1024, 1024
      %68 = vsyncadd [#allocation9], %s67
      %s69 = sshll.u32 [#allocation10], 4
      %s70 = int_to_ptr.vmem [resolvable:$true] %s69
      %75 = dma.hbm_to_vmem [thread:$0]  %s5, 1024, %s70, [#allocation9], 64, 64, 4
    $region25: #{tpu_custom_call.1} parent=1 // pred_fallthru
      _
    // Predicated region
    $region26: #{tpu_custom_call.1} parent=1 // pred_check
      _
    $region27: #{tpu_custom_call.1} parent=1 // pred_check_branch
      %77 = sbr.rel (0) target = $region29
    $region28: #{tpu_custom_call.1} parent=1 // pred_region
      _
    $region29: #{tpu_custom_call.1} parent=1 // pred_fallthru
      _
    // Predicated region
    $region30: #{tpu_custom_call.1} parent=1 // pred_check
      _
    $region31: #{tpu_custom_call.1} parent=1 // pred_check_branch
      %79 = sbr.rel (0) target = $region33
    $region32: #{tpu_custom_call.1} parent=1 // pred_region
      %80 = dma.done [#allocation3], 256
    $region33: #{tpu_custom_call.1} parent=1 // pred_fallthru
      _
    // Predicated region
    $region34: #{tpu_custom_call.1} parent=1 // pred_check
      _
    $region35: #{tpu_custom_call.1} parent=1 // pred_check_branch
      %82 = sbr.rel (0) target = $region37
    $region36: #{tpu_custom_call.1} parent=1 // pred_region
      %83 = dma.done [#allocation6], 16384
    $region37: #{tpu_custom_call.1} parent=1 // pred_fallthru
      _
    // Predicated region
    $region38: #{tpu_custom_call.1} parent=1 // pred_check
      _
    $region39: #{tpu_custom_call.1} parent=1 // pred_check_branch
      %85 = sbr.rel (0) target = $region41
    $region40: #{tpu_custom_call.1} parent=1 // pred_region
      %86 = dma.done [#allocation6], 128
    $region41: #{tpu_custom_call.1} parent=1 // pred_fallthru
      _
    // Predicated region
    $region42: #{tpu_custom_call.1} parent=1 // pred_check
      _
    $region43: #{tpu_custom_call.1} parent=1 // pred_check_branch
      %88 = sbr.rel (0) target = $region45
    $region44: #{tpu_custom_call.1} parent=1 // pred_region
      %89 = dma.done [#allocation9], 8192
    $region45: #{tpu_custom_call.1} parent=1 // pred_fallthru
      _
    // Predicated region
    $region46: #{tpu_custom_call.1} parent=1 // pred_check
      _
    $region47: #{tpu_custom_call.1} parent=1 // pred_check_branch
      %91 = sbr.rel (0) target = $region49
    $region48: #{tpu_custom_call.1} parent=1 // pred_region
      %92 = dma.done [#allocation9], 1024
    $region49: #{tpu_custom_call.1} parent=1 // pred_fallthru
      _
    %v94 = vld [vmem:[#allocation2] sm:$0xff]
    %v95 = vld [vmem:[#allocation2 + $0x8] sm:$0xff]
    %v96 = vld [vmem:[#allocation5] sm:$0xff]
    %v97 = vld [vmem:[#allocation5 + $0x8] sm:$0xff]
    %v98 = vld [vmem:[#allocation5 + $0x10] sm:$0xff]
    %v99 = vld [vmem:[#allocation5 + $0x18] sm:$0xff]
    %v100 = vld [vmem:[#allocation5 + $0x20] sm:$0xff]
    %v101 = vld [vmem:[#allocation5 + $0x28] sm:$0xff]
    %v102 = vld [vmem:[#allocation5 + $0x30] sm:$0xff]
    %v103 = vld [vmem:[#allocation5 + $0x38] sm:$0xff]
    %v104 = vld [vmem:[#allocation5 + $0x40] sm:$0xff]
    %v105 = vld [vmem:[#allocation5 + $0x48] sm:$0xff]
    %v106 = vld [vmem:[#allocation5 + $0x50] sm:$0xff]
    %v107 = vld [vmem:[#allocation5 + $0x58] sm:$0xff]
    %v108 = vld [vmem:[#allocation5 + $0x60] sm:$0xff]
    %v109 = vld [vmem:[#allocation5 + $0x68] sm:$0xff]
    %v110 = vld [vmem:[#allocation5 + $0x70] sm:$0xff]
    %v111 = vld [vmem:[#allocation5 + $0x78] sm:$0xff]
    %v112 = vld [vmem:[#allocation5 + $0x80] sm:$0xff]
    %v113 = vld [vmem:[#allocation5 + $0x88] sm:$0xff]
    %v114 = vld [vmem:[#allocation5 + $0x90] sm:$0xff]
    %v115 = vld [vmem:[#allocation5 + $0x98] sm:$0xff]
    %v116 = vld [vmem:[#allocation5 + $0xa0] sm:$0xff]
    %v117 = vld [vmem:[#allocation5 + $0xa8] sm:$0xff]
    %v118 = vld [vmem:[#allocation5 + $0xb0] sm:$0xff]
    %v119 = vld [vmem:[#allocation5 + $0xb8] sm:$0xff]
    %v120 = vld [vmem:[#allocation5 + $0xc0] sm:$0xff]
    %v121 = vld [vmem:[#allocation5 + $0xc8] sm:$0xff]
    %v122 = vld [vmem:[#allocation5 + $0xd0] sm:$0xff]
    %v123 = vld [vmem:[#allocation5 + $0xd8] sm:$0xff]
    %v124 = vld [vmem:[#allocation5 + $0xe0] sm:$0xff]
    %v125 = vld [vmem:[#allocation5 + $0xe8] sm:$0xff]
    %v126 = vld [vmem:[#allocation5 + $0xf0] sm:$0xff]
    %v127 = vld [vmem:[#allocation5 + $0xf8] sm:$0xff]
    %v128 = vld [vmem:[#allocation5 + $0x100] sm:$0xff]
    %v129 = vld [vmem:[#allocation5 + $0x108] sm:$0xff]
    %v130 = vld [vmem:[#allocation5 + $0x110] sm:$0xff]
    %v131 = vld [vmem:[#allocation5 + $0x118] sm:$0xff]
    %v132 = vld [vmem:[#allocation5 + $0x120] sm:$0xff]
    %v133 = vld [vmem:[#allocation5 + $0x128] sm:$0xff]
    %v134 = vld [vmem:[#allocation5 + $0x130] sm:$0xff]
    %v135 = vld [vmem:[#allocation5 + $0x138] sm:$0xff]
    %v136 = vld [vmem:[#allocation5 + $0x140] sm:$0xff]
    %v137 = vld [vmem:[#allocation5 + $0x148] sm:$0xff]
    %v138 = vld [vmem:[#allocation5 + $0x150] sm:$0xff]
    %v139 = vld [vmem:[#allocation5 + $0x158] sm:$0xff]
    %v140 = vld [vmem:[#allocation5 + $0x160] sm:$0xff]
    %v141 = vld [vmem:[#allocation5 + $0x168] sm:$0xff]
    %v142 = vld [vmem:[#allocation5 + $0x170] sm:$0xff]
    %v143 = vld [vmem:[#allocation5 + $0x178] sm:$0xff]
    %v144 = vld [vmem:[#allocation5 + $0x180] sm:$0xff]
    %v145 = vld [vmem:[#allocation5 + $0x188] sm:$0xff]
    %v146 = vld [vmem:[#allocation5 + $0x190] sm:$0xff]
    %v147 = vld [vmem:[#allocation5 + $0x198] sm:$0xff]
    %v148 = vld [vmem:[#allocation5 + $0x1a0] sm:$0xff]
    %v149 = vld [vmem:[#allocation5 + $0x1a8] sm:$0xff]
    %v150 = vld [vmem:[#allocation5 + $0x1b0] sm:$0xff]
    %v151 = vld [vmem:[#allocation5 + $0x1b8] sm:$0xff]
    %v152 = vld [vmem:[#allocation5 + $0x1c0] sm:$0xff]
    %v153 = vld [vmem:[#allocation5 + $0x1c8] sm:$0xff]
    %v154 = vld [vmem:[#allocation5 + $0x1d0] sm:$0xff]
    %v155 = vld [vmem:[#allocation5 + $0x1d8] sm:$0xff]
    %v156 = vld [vmem:[#allocation5 + $0x1e0] sm:$0xff]
    %v157 = vld [vmem:[#allocation5 + $0x1e8] sm:$0xff]
    %v158 = vld [vmem:[#allocation5 + $0x1f0] sm:$0xff]
    %v159 = vld [vmem:[#allocation5 + $0x1f8] sm:$0xff]
    %v160 = vld [vmem:[#allocation5 + $0x200] sm:$0xff]
    %v161 = vld [vmem:[#allocation5 + $0x208] sm:$0xff]
    %v162 = vld [vmem:[#allocation5 + $0x210] sm:$0xff]
    %v163 = vld [vmem:[#allocation5 + $0x218] sm:$0xff]
    %v164 = vld [vmem:[#allocation5 + $0x220] sm:$0xff]
    %v165 = vld [vmem:[#allocation5 + $0x228] sm:$0xff]
    %v166 = vld [vmem:[#allocation5 + $0x230] sm:$0xff]
    %v167 = vld [vmem:[#allocation5 + $0x238] sm:$0xff]
    %v168 = vld [vmem:[#allocation5 + $0x240] sm:$0xff]
    %v169 = vld [vmem:[#allocation5 + $0x248] sm:$0xff]
    %v170 = vld [vmem:[#allocation5 + $0x250] sm:$0xff]
    %v171 = vld [vmem:[#allocation5 + $0x258] sm:$0xff]
    %v172 = vld [vmem:[#allocation5 + $0x260] sm:$0xff]
    %v173 = vld [vmem:[#allocation5 + $0x268] sm:$0xff]
    %v174 = vld [vmem:[#allocation5 + $0x270] sm:$0xff]
    %v175 = vld [vmem:[#allocation5 + $0x278] sm:$0xff]
    %v176 = vld [vmem:[#allocation5 + $0x280] sm:$0xff]
    %v177 = vld [vmem:[#allocation5 + $0x288] sm:$0xff]
    %v178 = vld [vmem:[#allocation5 + $0x290] sm:$0xff]
    %v179 = vld [vmem:[#allocation5 + $0x298] sm:$0xff]
    %v180 = vld [vmem:[#allocation5 + $0x2a0] sm:$0xff]
    %v181 = vld [vmem:[#allocation5 + $0x2a8] sm:$0xff]
    %v182 = vld [vmem:[#allocation5 + $0x2b0] sm:$0xff]
    %v183 = vld [vmem:[#allocation5 + $0x2b8] sm:$0xff]
    %v184 = vld [vmem:[#allocation5 + $0x2c0] sm:$0xff]
    %v185 = vld [vmem:[#allocation5 + $0x2c8] sm:$0xff]
    %v186 = vld [vmem:[#allocation5 + $0x2d0] sm:$0xff]
    %v187 = vld [vmem:[#allocation5 + $0x2d8] sm:$0xff]
    %v188 = vld [vmem:[#allocation5 + $0x2e0] sm:$0xff]
    %v189 = vld [vmem:[#allocation5 + $0x2e8] sm:$0xff]
    %v190 = vld [vmem:[#allocation5 + $0x2f0] sm:$0xff]
    %v191 = vld [vmem:[#allocation5 + $0x2f8] sm:$0xff]
    %v192 = vld [vmem:[#allocation5 + $0x300] sm:$0xff]
    %v193 = vld [vmem:[#allocation5 + $0x308] sm:$0xff]
    %v194 = vld [vmem:[#allocation5 + $0x310] sm:$0xff]
    %v195 = vld [vmem:[#allocation5 + $0x318] sm:$0xff]
    %v196 = vld [vmem:[#allocation5 + $0x320] sm:$0xff]
    %v197 = vld [vmem:[#allocation5 + $0x328] sm:$0xff]
    %v198 = vld [vmem:[#allocation5 + $0x330] sm:$0xff]
    %v199 = vld [vmem:[#allocation5 + $0x338] sm:$0xff]
    %v200 = vld [vmem:[#allocation5 + $0x340] sm:$0xff]
    %v201 = vld [vmem:[#allocation5 + $0x348] sm:$0xff]
    %v202 = vld [vmem:[#allocation5 + $0x350] sm:$0xff]
    %v203 = vld [vmem:[#allocation5 + $0x358] sm:$0xff]
    %v204 = vld [vmem:[#allocation5 + $0x360] sm:$0xff]
    %v205 = vld [vmem:[#allocation5 + $0x368] sm:$0xff]
    %v206 = vld [vmem:[#allocation5 + $0x370] sm:$0xff]
    %v207 = vld [vmem:[#allocation5 + $0x378] sm:$0xff]
    %v208 = vld [vmem:[#allocation5 + $0x380] sm:$0xff]
    %v209 = vld [vmem:[#allocation5 + $0x388] sm:$0xff]
    %v210 = vld [vmem:[#allocation5 + $0x390] sm:$0xff]
    %v211 = vld [vmem:[#allocation5 + $0x398] sm:$0xff]
    %v212 = vld [vmem:[#allocation5 + $0x3a0] sm:$0xff]
    %v213 = vld [vmem:[#allocation5 + $0x3a8] sm:$0xff]
    %v214 = vld [vmem:[#allocation5 + $0x3b0] sm:$0xff]
    %v215 = vld [vmem:[#allocation5 + $0x3b8] sm:$0xff]
    %v216 = vld [vmem:[#allocation5 + $0x3c0] sm:$0xff]
    %v217 = vld [vmem:[#allocation5 + $0x3c8] sm:$0xff]
    %v218 = vld [vmem:[#allocation5 + $0x3d0] sm:$0xff]
    %v219 = vld [vmem:[#allocation5 + $0x3d8] sm:$0xff]
    %v220 = vld [vmem:[#allocation5 + $0x3e0] sm:$0xff]
    %v221 = vld [vmem:[#allocation5 + $0x3e8] sm:$0xff]
    %v222 = vld [vmem:[#allocation5 + $0x3f0] sm:$0xff]
    %v223 = vld [vmem:[#allocation5 + $0x3f8] sm:$0xff]
    %v224 = vld [vmem:[#allocation7] sm:$0xff]
    %v226 = vlaneseq
    %v227 = vshrl.u32 %v226, 7
    %v228 = vsub.s32 0, %v227
    %v229 = vrot.slane %v224, %v228
    %v230 = vlaneseq
    %v231 = vshrl.u32 %v230, 7
    %v232 = vsub.s32 1, %v231
    %v233 = vrot.slane %v224, %v232
    %v234 = vlaneseq
    %v235 = vshrl.u32 %v234, 7
    %v236 = vsub.s32 2, %v235
    %v237 = vrot.slane %v224, %v236
    %v238 = vlaneseq
    %v239 = vshrl.u32 %v238, 7
    %v240 = vsub.s32 3, %v239
    %v241 = vrot.slane %v224, %v240
    %v242 = vlaneseq
    %v243 = vshrl.u32 %v242, 7
    %v244 = vsub.s32 4, %v243
    %v245 = vrot.slane %v224, %v244
    %v246 = vlaneseq
    %v247 = vshrl.u32 %v246, 7
    %v248 = vsub.s32 5, %v247
    %v249 = vrot.slane %v224, %v248
    %v250 = vlaneseq
    %v251 = vshrl.u32 %v250, 7
    %v252 = vsub.s32 6, %v251
    %v253 = vrot.slane %v224, %v252
    %v254 = vlaneseq
    %v255 = vshrl.u32 %v254, 7
    %v256 = vsub.s32 7, %v255
    %v257 = vrot.slane %v224, %v256
    %v268 = vunpack.c.l.b16 %v94
    %v269 = vunpack.c.h.b16 %v94
    %v270 = vunpack.c.l.b16 %v95
    %v271 = vunpack.c.h.b16 %v95
    %v272 = vpack.c.b16 %v270, %v268
    %v273 = vpack.c.b16 %v271, %v269
    %v404 = vunpack.c.l.b16 %v96
    %v405 = vunpack.c.h.b16 %v96
    %v406 = vunpack.c.l.b16 %v97
    %v407 = vunpack.c.h.b16 %v97
    %v408 = vunpack.c.l.b16 %v98
    %v409 = vunpack.c.h.b16 %v98
    %v410 = vunpack.c.l.b16 %v99
    %v411 = vunpack.c.h.b16 %v99
    %v412 = vunpack.c.l.b16 %v100
    %v413 = vunpack.c.h.b16 %v100
    %v414 = vunpack.c.l.b16 %v101
    %v415 = vunpack.c.h.b16 %v101
    %v416 = vunpack.c.l.b16 %v102
    %v417 = vunpack.c.h.b16 %v102
    %v418 = vunpack.c.l.b16 %v103
    %v419 = vunpack.c.h.b16 %v103
    %v420 = vunpack.c.l.b16 %v104
    %v421 = vunpack.c.h.b16 %v104
    %v422 = vunpack.c.l.b16 %v105
    %v423 = vunpack.c.h.b16 %v105
    %v424 = vunpack.c.l.b16 %v106
    %v425 = vunpack.c.h.b16 %v106
    %v426 = vunpack.c.l.b16 %v107
    %v427 = vunpack.c.h.b16 %v107
    %v428 = vunpack.c.l.b16 %v108
    %v429 = vunpack.c.h.b16 %v108
    %v430 = vunpack.c.l.b16 %v109
    %v431 = vunpack.c.h.b16 %v109
    %v432 = vunpack.c.l.b16 %v110
    %v433 = vunpack.c.h.b16 %v110
    %v434 = vunpack.c.l.b16 %v111
    %v435 = vunpack.c.h.b16 %v111
    %v436 = vunpack.c.l.b16 %v112
    %v437 = vunpack.c.h.b16 %v112
    %v438 = vunpack.c.l.b16 %v113
    %v439 = vunpack.c.h.b16 %v113
    %v440 = vunpack.c.l.b16 %v114
    %v441 = vunpack.c.h.b16 %v114
    %v442 = vunpack.c.l.b16 %v115
    %v443 = vunpack.c.h.b16 %v115
    %v444 = vunpack.c.l.b16 %v116
    %v445 = vunpack.c.h.b16 %v116
    %v446 = vunpack.c.l.b16 %v117
    %v447 = vunpack.c.h.b16 %v117
    %v448 = vunpack.c.l.b16 %v118
    %v449 = vunpack.c.h.b16 %v118
    %v450 = vunpack.c.l.b16 %v119
    %v451 = vunpack.c.h.b16 %v119
    %v452 = vunpack.c.l.b16 %v120
    %v453 = vunpack.c.h.b16 %v120
    %v454 = vunpack.c.l.b16 %v121
    %v455 = vunpack.c.h.b16 %v121
    %v456 = vunpack.c.l.b16 %v122
    %v457 = vunpack.c.h.b16 %v122
    %v458 = vunpack.c.l.b16 %v123
    %v459 = vunpack.c.h.b16 %v123
    %v460 = vunpack.c.l.b16 %v124
    %v461 = vunpack.c.h.b16 %v124
    %v462 = vunpack.c.l.b16 %v125
    %v463 = vunpack.c.h.b16 %v125
    %v464 = vunpack.c.l.b16 %v126
    %v465 = vunpack.c.h.b16 %v126
    %v466 = vunpack.c.l.b16 %v127
    %v467 = vunpack.c.h.b16 %v127
    %v468 = vunpack.c.l.b16 %v128
    %v469 = vunpack.c.h.b16 %v128
    %v470 = vunpack.c.l.b16 %v129
    %v471 = vunpack.c.h.b16 %v129
    %v472 = vunpack.c.l.b16 %v130
    %v473 = vunpack.c.h.b16 %v130
    %v474 = vunpack.c.l.b16 %v131
    %v475 = vunpack.c.h.b16 %v131
    %v476 = vunpack.c.l.b16 %v132
    %v477 = vunpack.c.h.b16 %v132
    %v478 = vunpack.c.l.b16 %v133
    %v479 = vunpack.c.h.b16 %v133
    %v480 = vunpack.c.l.b16 %v134
    %v481 = vunpack.c.h.b16 %v134
    %v482 = vunpack.c.l.b16 %v135
    %v483 = vunpack.c.h.b16 %v135
    %v484 = vunpack.c.l.b16 %v136
    %v485 = vunpack.c.h.b16 %v136
    %v486 = vunpack.c.l.b16 %v137
    %v487 = vunpack.c.h.b16 %v137
    %v488 = vunpack.c.l.b16 %v138
    %v489 = vunpack.c.h.b16 %v138
    %v490 = vunpack.c.l.b16 %v139
    %v491 = vunpack.c.h.b16 %v139
    %v492 = vunpack.c.l.b16 %v140
    %v493 = vunpack.c.h.b16 %v140
    %v494 = vunpack.c.l.b16 %v141
    %v495 = vunpack.c.h.b16 %v141
    %v496 = vunpack.c.l.b16 %v142
    %v497 = vunpack.c.h.b16 %v142
    %v498 = vunpack.c.l.b16 %v143
    %v499 = vunpack.c.h.b16 %v143
    %v500 = vunpack.c.l.b16 %v144
    %v501 = vunpack.c.h.b16 %v144
    %v502 = vunpack.c.l.b16 %v145
    %v503 = vunpack.c.h.b16 %v145
    %v504 = vunpack.c.l.b16 %v146
    %v505 = vunpack.c.h.b16 %v146
    %v506 = vunpack.c.l.b16 %v147
    %v507 = vunpack.c.h.b16 %v147
    %v508 = vunpack.c.l.b16 %v148
    %v509 = vunpack.c.h.b16 %v148
    %v510 = vunpack.c.l.b16 %v149
    %v511 = vunpack.c.h.b16 %v149
    %v512 = vunpack.c.l.b16 %v150
    %v513 = vunpack.c.h.b16 %v150
    %v514 = vunpack.c.l.b16 %v151
    %v515 = vunpack.c.h.b16 %v151
    %v516 = vunpack.c.l.b16 %v152
    %v517 = vunpack.c.h.b16 %v152
    %v518 = vunpack.c.l.b16 %v153
    %v519 = vunpack.c.h.b16 %v153
    %v520 = vunpack.c.l.b16 %v154
    %v521 = vunpack.c.h.b16 %v154
    %v522 = vunpack.c.l.b16 %v155
    %v523 = vunpack.c.h.b16 %v155
    %v524 = vunpack.c.l.b16 %v156
    %v525 = vunpack.c.h.b16 %v156
    %v526 = vunpack.c.l.b16 %v157
    %v527 = vunpack.c.h.b16 %v157
    %v528 = vunpack.c.l.b16 %v158
    %v529 = vunpack.c.h.b16 %v158
    %v530 = vunpack.c.l.b16 %v159
    %v531 = vunpack.c.h.b16 %v159
    %v532 = vunpack.c.l.b16 %v160
    %v533 = vunpack.c.h.b16 %v160
    %v534 = vunpack.c.l.b16 %v161
    %v535 = vunpack.c.h.b16 %v161
    %v536 = vunpack.c.l.b16 %v162
    %v537 = vunpack.c.h.b16 %v162
    %v538 = vunpack.c.l.b16 %v163
    %v539 = vunpack.c.h.b16 %v163
    %v540 = vunpack.c.l.b16 %v164
    %v541 = vunpack.c.h.b16 %v164
    %v542 = vunpack.c.l.b16 %v165
    %v543 = vunpack.c.h.b16 %v165
    %v544 = vunpack.c.l.b16 %v166
    %v545 = vunpack.c.h.b16 %v166
    %v546 = vunpack.c.l.b16 %v167
    %v547 = vunpack.c.h.b16 %v167
    %v548 = vunpack.c.l.b16 %v168
    %v549 = vunpack.c.h.b16 %v168
    %v550 = vunpack.c.l.b16 %v169
    %v551 = vunpack.c.h.b16 %v169
    %v552 = vunpack.c.l.b16 %v170
    %v553 = vunpack.c.h.b16 %v170
    %v554 = vunpack.c.l.b16 %v171
    %v555 = vunpack.c.h.b16 %v171
    %v556 = vunpack.c.l.b16 %v172
    %v557 = vunpack.c.h.b16 %v172
    %v558 = vunpack.c.l.b16 %v173
    %v559 = vunpack.c.h.b16 %v173
    %v560 = vunpack.c.l.b16 %v174
    %v561 = vunpack.c.h.b16 %v174
    %v562 = vunpack.c.l.b16 %v175
    %v563 = vunpack.c.h.b16 %v175
    %v564 = vunpack.c.l.b16 %v176
    %v565 = vunpack.c.h.b16 %v176
    %v566 = vunpack.c.l.b16 %v177
    %v567 = vunpack.c.h.b16 %v177
    %v568 = vunpack.c.l.b16 %v178
    %v569 = vunpack.c.h.b16 %v178
    %v570 = vunpack.c.l.b16 %v179
    %v571 = vunpack.c.h.b16 %v179
    %v572 = vunpack.c.l.b16 %v180
    %v573 = vunpack.c.h.b16 %v180
    %v574 = vunpack.c.l.b16 %v181
    %v575 = vunpack.c.h.b16 %v181
    %v576 = vunpack.c.l.b16 %v182
    %v577 = vunpack.c.h.b16 %v182
    %v578 = vunpack.c.l.b16 %v183
    %v579 = vunpack.c.h.b16 %v183
    %v580 = vunpack.c.l.b16 %v184
    %v581 = vunpack.c.h.b16 %v184
    %v582 = vunpack.c.l.b16 %v185
    %v583 = vunpack.c.h.b16 %v185
    %v584 = vunpack.c.l.b16 %v186
    %v585 = vunpack.c.h.b16 %v186
    %v586 = vunpack.c.l.b16 %v187
    %v587 = vunpack.c.h.b16 %v187
    %v588 = vunpack.c.l.b16 %v188
    %v589 = vunpack.c.h.b16 %v188
    %v590 = vunpack.c.l.b16 %v189
    %v591 = vunpack.c.h.b16 %v189
    %v592 = vunpack.c.l.b16 %v190
    %v593 = vunpack.c.h.b16 %v190
    %v594 = vunpack.c.l.b16 %v191
    %v595 = vunpack.c.h.b16 %v191
    %v596 = vunpack.c.l.b16 %v192
    %v597 = vunpack.c.h.b16 %v192
    %v598 = vunpack.c.l.b16 %v193
    %v599 = vunpack.c.h.b16 %v193
    %v600 = vunpack.c.l.b16 %v194
    %v601 = vunpack.c.h.b16 %v194
    %v602 = vunpack.c.l.b16 %v195
    %v603 = vunpack.c.h.b16 %v195
    %v604 = vunpack.c.l.b16 %v196
    %v605 = vunpack.c.h.b16 %v196
    %v606 = vunpack.c.l.b16 %v197
    %v607 = vunpack.c.h.b16 %v197
    %v608 = vunpack.c.l.b16 %v198
    %v609 = vunpack.c.h.b16 %v198
    %v610 = vunpack.c.l.b16 %v199
    %v611 = vunpack.c.h.b16 %v199
    %v612 = vunpack.c.l.b16 %v200
    %v613 = vunpack.c.h.b16 %v200
    %v614 = vunpack.c.l.b16 %v201
    %v615 = vunpack.c.h.b16 %v201
    %v616 = vunpack.c.l.b16 %v202
    %v617 = vunpack.c.h.b16 %v202
    %v618 = vunpack.c.l.b16 %v203
    %v619 = vunpack.c.h.b16 %v203
    %v620 = vunpack.c.l.b16 %v204
    %v621 = vunpack.c.h.b16 %v204
    %v622 = vunpack.c.l.b16 %v205
    %v623 = vunpack.c.h.b16 %v205
    %v624 = vunpack.c.l.b16 %v206
    %v625 = vunpack.c.h.b16 %v206
    %v626 = vunpack.c.l.b16 %v207
    %v627 = vunpack.c.h.b16 %v207
    %v628 = vunpack.c.l.b16 %v208
    %v629 = vunpack.c.h.b16 %v208
    %v630 = vunpack.c.l.b16 %v209
    %v631 = vunpack.c.h.b16 %v209
    %v632 = vunpack.c.l.b16 %v210
    %v633 = vunpack.c.h.b16 %v210
    %v634 = vunpack.c.l.b16 %v211
    %v635 = vunpack.c.h.b16 %v211
    %v636 = vunpack.c.l.b16 %v212
    %v637 = vunpack.c.h.b16 %v212
    %v638 = vunpack.c.l.b16 %v213
    %v639 = vunpack.c.h.b16 %v213
    %v640 = vunpack.c.l.b16 %v214
    %v641 = vunpack.c.h.b16 %v214
    %v642 = vunpack.c.l.b16 %v215
    %v643 = vunpack.c.h.b16 %v215
    %v644 = vunpack.c.l.b16 %v216
    %v645 = vunpack.c.h.b16 %v216
    %v646 = vunpack.c.l.b16 %v217
    %v647 = vunpack.c.h.b16 %v217
    %v648 = vunpack.c.l.b16 %v218
    %v649 = vunpack.c.h.b16 %v218
    %v650 = vunpack.c.l.b16 %v219
    %v651 = vunpack.c.h.b16 %v219
    %v652 = vunpack.c.l.b16 %v220
    %v653 = vunpack.c.h.b16 %v220
    %v654 = vunpack.c.l.b16 %v221
    %v655 = vunpack.c.h.b16 %v221
    %v656 = vunpack.c.l.b16 %v222
    %v657 = vunpack.c.h.b16 %v222
    %v658 = vunpack.c.l.b16 %v223
    %v659 = vunpack.c.h.b16 %v223
    %v660 = vpack.c.b16 %v412, %v404
    %v661 = vpack.c.b16 %v413, %v405
    %v662 = vpack.c.b16 %v414, %v406
    %v663 = vpack.c.b16 %v415, %v407
    %v664 = vpack.c.b16 %v416, %v408
    %v665 = vpack.c.b16 %v417, %v409
    %v666 = vpack.c.b16 %v418, %v410
    %v667 = vpack.c.b16 %v419, %v411
    %v668 = vpack.c.b16 %v428, %v420
    %v669 = vpack.c.b16 %v429, %v421
    %v670 = vpack.c.b16 %v430, %v422
    %v671 = vpack.c.b16 %v431, %v423
    %v672 = vpack.c.b16 %v432, %v424
    %v673 = vpack.c.b16 %v433, %v425
    %v674 = vpack.c.b16 %v434, %v426
    %v675 = vpack.c.b16 %v435, %v427
    %v676 = vpack.c.b16 %v444, %v436
    %v677 = vpack.c.b16 %v445, %v437
    %v678 = vpack.c.b16 %v446, %v438
    %v679 = vpack.c.b16 %v447, %v439
    %v680 = vpack.c.b16 %v448, %v440
    %v681 = vpack.c.b16 %v449, %v441
    %v682 = vpack.c.b16 %v450, %v442
    %v683 = vpack.c.b16 %v451, %v443
    %v684 = vpack.c.b16 %v460, %v452
    %v685 = vpack.c.b16 %v461, %v453
    %v686 = vpack.c.b16 %v462, %v454
    %v687 = vpack.c.b16 %v463, %v455
    %v688 = vpack.c.b16 %v464, %v456
    %v689 = vpack.c.b16 %v465, %v457
    %v690 = vpack.c.b16 %v466, %v458
    %v691 = vpack.c.b16 %v467, %v459
    %v692 = vpack.c.b16 %v476, %v468
    %v693 = vpack.c.b16 %v477, %v469
    %v694 = vpack.c.b16 %v478, %v470
    %v695 = vpack.c.b16 %v479, %v471
    %v696 = vpack.c.b16 %v480, %v472
    %v697 = vpack.c.b16 %v481, %v473
    %v698 = vpack.c.b16 %v482, %v474
    %v699 = vpack.c.b16 %v483, %v475
    %v700 = vpack.c.b16 %v492, %v484
    %v701 = vpack.c.b16 %v493, %v485
    %v702 = vpack.c.b16 %v494, %v486
    %v703 = vpack.c.b16 %v495, %v487
    %v704 = vpack.c.b16 %v496, %v488
    %v705 = vpack.c.b16 %v497, %v489
    %v706 = vpack.c.b16 %v498, %v490
    %v707 = vpack.c.b16 %v499, %v491
    %v708 = vpack.c.b16 %v508, %v500
    %v709 = vpack.c.b16 %v509, %v501
    %v710 = vpack.c.b16 %v510, %v502
    %v711 = vpack.c.b16 %v511, %v503
    %v712 = vpack.c.b16 %v512, %v504
    %v713 = vpack.c.b16 %v513, %v505
    %v714 = vpack.c.b16 %v514, %v506
    %v715 = vpack.c.b16 %v515, %v507
    %v716 = vpack.c.b16 %v524, %v516
    %v717 = vpack.c.b16 %v525, %v517
    %v718 = vpack.c.b16 %v526, %v518
    %v719 = vpack.c.b16 %v527, %v519
    %v720 = vpack.c.b16 %v528, %v520
    %v721 = vpack.c.b16 %v529, %v521
    %v722 = vpack.c.b16 %v530, %v522
    %v723 = vpack.c.b16 %v531, %v523
    %v724 = vpack.c.b16 %v540, %v532
    %v725 = vpack.c.b16 %v541, %v533
    %v726 = vpack.c.b16 %v542, %v534
    %v727 = vpack.c.b16 %v543, %v535
    %v728 = vpack.c.b16 %v544, %v536
    %v729 = vpack.c.b16 %v545, %v537
    %v730 = vpack.c.b16 %v546, %v538
    %v731 = vpack.c.b16 %v547, %v539
    %v732 = vpack.c.b16 %v556, %v548
    %v733 = vpack.c.b16 %v557, %v549
    %v734 = vpack.c.b16 %v558, %v550
    %v735 = vpack.c.b16 %v559, %v551
    %v736 = vpack.c.b16 %v560, %v552
    %v737 = vpack.c.b16 %v561, %v553
    %v738 = vpack.c.b16 %v562, %v554
    %v739 = vpack.c.b16 %v563, %v555
    %v740 = vpack.c.b16 %v572, %v564
    %v741 = vpack.c.b16 %v573, %v565
    %v742 = vpack.c.b16 %v574, %v566
    %v743 = vpack.c.b16 %v575, %v567
    %v744 = vpack.c.b16 %v576, %v568
    %v745 = vpack.c.b16 %v577, %v569
    %v746 = vpack.c.b16 %v578, %v570
    %v747 = vpack.c.b16 %v579, %v571
    %v748 = vpack.c.b16 %v588, %v580
    %v749 = vpack.c.b16 %v589, %v581
    %v750 = vpack.c.b16 %v590, %v582
    %v751 = vpack.c.b16 %v591, %v583
    %v752 = vpack.c.b16 %v592, %v584
    %v753 = vpack.c.b16 %v593, %v585
    %v754 = vpack.c.b16 %v594, %v586
    %v755 = vpack.c.b16 %v595, %v587
    %v756 = vpack.c.b16 %v604, %v596
    %v757 = vpack.c.b16 %v605, %v597
    %v758 = vpack.c.b16 %v606, %v598
    %v759 = vpack.c.b16 %v607, %v599
    %v760 = vpack.c.b16 %v608, %v600
    %v761 = vpack.c.b16 %v609, %v601
    %v762 = vpack.c.b16 %v610, %v602
    %v763 = vpack.c.b16 %v611, %v603
    %v764 = vpack.c.b16 %v620, %v612
    %v765 = vpack.c.b16 %v621, %v613
    %v766 = vpack.c.b16 %v622, %v614
    %v767 = vpack.c.b16 %v623, %v615
    %v768 = vpack.c.b16 %v624, %v616
    %v769 = vpack.c.b16 %v625, %v617
    %v770 = vpack.c.b16 %v626, %v618
    %v771 = vpack.c.b16 %v627, %v619
    %v772 = vpack.c.b16 %v636, %v628
    %v773 = vpack.c.b16 %v637, %v629
    %v774 = vpack.c.b16 %v638, %v630
    %v775 = vpack.c.b16 %v639, %v631
    %v776 = vpack.c.b16 %v640, %v632
    %v777 = vpack.c.b16 %v641, %v633
    %v778 = vpack.c.b16 %v642, %v634
    %v779 = vpack.c.b16 %v643, %v635
    %v780 = vpack.c.b16 %v652, %v644
    %v781 = vpack.c.b16 %v653, %v645
    %v782 = vpack.c.b16 %v654, %v646
    %v783 = vpack.c.b16 %v655, %v647
    %v784 = vpack.c.b16 %v656, %v648
    %v785 = vpack.c.b16 %v657, %v649
    %v786 = vpack.c.b16 %v658, %v650
    %v787 = vpack.c.b16 %v659, %v651
    %916 = vmatprep.subr.bf16.mxu0 %v661
    %917 = vmatpush1.bf16.msra.mxu0 %v660
    %918 = vmatprep.subr.bf16.mxu0 %v669
    %919 = vmatpush1.bf16.msra.mxu0 %v668
    %920 = vmatprep.subr.bf16.mxu0 %v677
    %921 = vmatpush1.bf16.msra.mxu0 %v676
    %922 = vmatprep.subr.bf16.mxu0 %v685
    %923 = vmatpush1.bf16.msra.mxu0 %v684
    %924 = vmatprep.subr.bf16.mxu0 %v693
    %925 = vmatpush1.bf16.msra.mxu0 %v692
    %926 = vmatprep.subr.bf16.mxu0 %v701
    %927 = vmatpush1.bf16.msra.mxu0 %v700
    %928 = vmatprep.subr.bf16.mxu0 %v709
    %929 = vmatpush1.bf16.msra.mxu0 %v708
    %930 = vmatprep.subr.bf16.mxu0 %v717
    %931 = vmatpush1.bf16.msra.mxu0 %v716
    %932 = vmatprep.subr.bf16.mxu0 %v725
    %933 = vmatpush1.bf16.msra.mxu0 %v724
    %934 = vmatprep.subr.bf16.mxu0 %v733
    %935 = vmatpush1.bf16.msra.mxu0 %v732
    %936 = vmatprep.subr.bf16.mxu0 %v741
    %937 = vmatpush1.bf16.msra.mxu0 %v740
    %938 = vmatprep.subr.bf16.mxu0 %v749
    %939 = vmatpush1.bf16.msra.mxu0 %v748
    %940 = vmatprep.subr.bf16.mxu0 %v757
    %941 = vmatpush1.bf16.msra.mxu0 %v756
    %942 = vmatprep.subr.bf16.mxu0 %v765
    %943 = vmatpush1.bf16.msra.mxu0 %v764
    %944 = vmatprep.subr.bf16.mxu0 %v773
    %945 = vmatpush1.bf16.msra.mxu0 %v772
    %946 = vmatprep.subr.bf16.mxu0 %v781
    %947 = vmatpush1.bf16.msra.mxu0 %v780
    %948 = vmatprep.mubr.bf16.mxu0 %v273
    %949 = vmatmul.mubr.bf16.gmra.mrb[0].mxu0 %v272
    %v950 = vpop.f32.mrb[0].mxu0
    %v951 = vadd.f32 %v229, %v950
    %v952 = vpop.f32.mrb[0].mxu0
    %v953 = vadd.f32 %v233, %v952
    %v954 = vpop.f32.mrb[0].mxu0
    %v955 = vadd.f32 %v229, %v954
    %v956 = vpop.f32.mrb[0].mxu0
    %v957 = vadd.f32 %v233, %v956
    %958 = vdwg.mxu0
    %959 = vmatprep.subr.bf16.mxu0 %v663
    %960 = vmatpush1.bf16.msra.mxu0 %v662
    %961 = vmatprep.subr.bf16.mxu0 %v671
    %962 = vmatpush1.bf16.msra.mxu0 %v670
    %963 = vmatprep.subr.bf16.mxu0 %v679
    %964 = vmatpush1.bf16.msra.mxu0 %v678
    %965 = vmatprep.subr.bf16.mxu0 %v687
    %966 = vmatpush1.bf16.msra.mxu0 %v686
    %967 = vmatprep.subr.bf16.mxu0 %v695
    %968 = vmatpush1.bf16.msra.mxu0 %v694
    %969 = vmatprep.subr.bf16.mxu0 %v703
    %970 = vmatpush1.bf16.msra.mxu0 %v702
    %971 = vmatprep.subr.bf16.mxu0 %v711
    %972 = vmatpush1.bf16.msra.mxu0 %v710
    %973 = vmatprep.subr.bf16.mxu0 %v719
    %974 = vmatpush1.bf16.msra.mxu0 %v718
    %975 = vmatprep.subr.bf16.mxu0 %v727
    %976 = vmatpush1.bf16.msra.mxu0 %v726
    %977 = vmatprep.subr.bf16.mxu0 %v735
    %978 = vmatpush1.bf16.msra.mxu0 %v734
    %979 = vmatprep.subr.bf16.mxu0 %v743
    %980 = vmatpush1.bf16.msra.mxu0 %v742
    %981 = vmatprep.subr.bf16.mxu0 %v751
    %982 = vmatpush1.bf16.msra.mxu0 %v750
    %983 = vmatprep.subr.bf16.mxu0 %v759
    %984 = vmatpush1.bf16.msra.mxu0 %v758
    %985 = vmatprep.subr.bf16.mxu0 %v767
    %986 = vmatpush1.bf16.msra.mxu0 %v766
    %987 = vmatprep.subr.bf16.mxu0 %v775
    %988 = vmatpush1.bf16.msra.mxu0 %v774
    %989 = vmatprep.subr.bf16.mxu0 %v783
    %990 = vmatpush1.bf16.msra.mxu0 %v782
    %991 = vmatprep.mubr.bf16.mxu0 %v273
    %992 = vmatmul.mubr.bf16.gmra.mrb[0].mxu0 %v272
    %v993 = vpop.f32.mrb[0].mxu0
    %v994 = vadd.f32 %v237, %v993
    %v995 = vpop.f32.mrb[0].mxu0
    %v996 = vadd.f32 %v241, %v995
    %v997 = vpop.f32.mrb[0].mxu0
    %v998 = vadd.f32 %v237, %v997
    %v999 = vpop.f32.mrb[0].mxu0
    %v1000 = vadd.f32 %v241, %v999
    %1001 = vdwg.mxu0
    %1002 = vmatprep.subr.bf16.mxu0 %v665
    %1003 = vmatpush1.bf16.msra.mxu0 %v664
    %1004 = vmatprep.subr.bf16.mxu0 %v673
    %1005 = vmatpush1.bf16.msra.mxu0 %v672
    %1006 = vmatprep.subr.bf16.mxu0 %v681
    %1007 = vmatpush1.bf16.msra.mxu0 %v680
    %1008 = vmatprep.subr.bf16.mxu0 %v689
    %1009 = vmatpush1.bf16.msra.mxu0 %v688
    %1010 = vmatprep.subr.bf16.mxu0 %v697
    %1011 = vmatpush1.bf16.msra.mxu0 %v696
    %1012 = vmatprep.subr.bf16.mxu0 %v705
    %1013 = vmatpush1.bf16.msra.mxu0 %v704
    %1014 = vmatprep.subr.bf16.mxu0 %v713
    %1015 = vmatpush1.bf16.msra.mxu0 %v712
    %1016 = vmatprep.subr.bf16.mxu0 %v721
    %1017 = vmatpush1.bf16.msra.mxu0 %v720
    %1018 = vmatprep.subr.bf16.mxu0 %v729
    %1019 = vmatpush1.bf16.msra.mxu0 %v728
    %1020 = vmatprep.subr.bf16.mxu0 %v737
    %1021 = vmatpush1.bf16.msra.mxu0 %v736
    %1022 = vmatprep.subr.bf16.mxu0 %v745
    %1023 = vmatpush1.bf16.msra.mxu0 %v744
    %1024 = vmatprep.subr.bf16.mxu0 %v753
    %1025 = vmatpush1.bf16.msra.mxu0 %v752
    %1026 = vmatprep.subr.bf16.mxu0 %v761
    %1027 = vmatpush1.bf16.msra.mxu0 %v760
    %1028 = vmatprep.subr.bf16.mxu0 %v769
    %1029 = vmatpush1.bf16.msra.mxu0 %v768
    %1030 = vmatprep.subr.bf16.mxu0 %v777
    %1031 = vmatpush1.bf16.msra.mxu0 %v776
    %1032 = vmatprep.subr.bf16.mxu0 %v785
    %1033 = vmatpush1.bf16.msra.mxu0 %v784
    %1034 = vmatprep.mubr.bf16.mxu0 %v273
    %1035 = vmatmul.mubr.bf16.gmra.mrb[0].mxu0 %v272
    %v1036 = vpop.f32.mrb[0].mxu0
    %v1037 = vadd.f32 %v245, %v1036
    %v1038 = vpop.f32.mrb[0].mxu0
    %v1039 = vadd.f32 %v249, %v1038
    %v1040 = vpop.f32.mrb[0].mxu0
    %v1041 = vadd.f32 %v245, %v1040
    %v1042 = vpop.f32.mrb[0].mxu0
    %v1043 = vadd.f32 %v249, %v1042
    %1044 = vdwg.mxu0
    %1045 = vmatprep.subr.bf16.mxu0 %v667
    %1046 = vmatpush1.bf16.msra.mxu0 %v666
    %1047 = vmatprep.subr.bf16.mxu0 %v675
    %1048 = vmatpush1.bf16.msra.mxu0 %v674
    %1049 = vmatprep.subr.bf16.mxu0 %v683
    %1050 = vmatpush1.bf16.msra.mxu0 %v682
    %1051 = vmatprep.subr.bf16.mxu0 %v691
    %1052 = vmatpush1.bf16.msra.mxu0 %v690
    %1053 = vmatprep.subr.bf16.mxu0 %v699
    %1054 = vmatpush1.bf16.msra.mxu0 %v698
    %1055 = vmatprep.subr.bf16.mxu0 %v707
    %1056 = vmatpush1.bf16.msra.mxu0 %v706
    %1057 = vmatprep.subr.bf16.mxu0 %v715
    %1058 = vmatpush1.bf16.msra.mxu0 %v714
    %1059 = vmatprep.subr.bf16.mxu0 %v723
    %1060 = vmatpush1.bf16.msra.mxu0 %v722
    %1061 = vmatprep.subr.bf16.mxu0 %v731
    %1062 = vmatpush1.bf16.msra.mxu0 %v730
    %1063 = vmatprep.subr.bf16.mxu0 %v739
    %1064 = vmatpush1.bf16.msra.mxu0 %v738
    %1065 = vmatprep.subr.bf16.mxu0 %v747
    %1066 = vmatpush1.bf16.msra.mxu0 %v746
    %1067 = vmatprep.subr.bf16.mxu0 %v755
    %1068 = vmatpush1.bf16.msra.mxu0 %v754
    %1069 = vmatprep.subr.bf16.mxu0 %v763
    %1070 = vmatpush1.bf16.msra.mxu0 %v762
    %1071 = vmatprep.subr.bf16.mxu0 %v771
    %1072 = vmatpush1.bf16.msra.mxu0 %v770
    %1073 = vmatprep.subr.bf16.mxu0 %v779
    %1074 = vmatpush1.bf16.msra.mxu0 %v778
    %1075 = vmatprep.subr.bf16.mxu0 %v787
    %1076 = vmatpush1.bf16.msra.mxu0 %v786
    %1077 = vmatprep.mubr.bf16.mxu0 %v273
    %1078 = vmatmul.mubr.bf16.gmra.mrb[0].mxu0 %v272
    %v1079 = vpop.f32.mrb[0].mxu0
    %v1080 = vadd.f32 %v253, %v1079
    %v1081 = vpop.f32.mrb[0].mxu0
    %v1082 = vadd.f32 %v257, %v1081
    %v1083 = vpop.f32.mrb[0].mxu0
    %v1084 = vadd.f32 %v253, %v1083
    %v1085 = vpop.f32.mrb[0].mxu0
    %v1086 = vadd.f32 %v257, %v1085
    %1087 = vdwg.mxu0
    %v1088 = vmax.f32 %v951, 0.0
    %v1089 = vmax.f32 %v953, 0.0
    %v1090 = vmax.f32 %v994, 0.0
    %v1091 = vmax.f32 %v996, 0.0
    %v1092 = vmax.f32 %v1037, 0.0
    %v1093 = vmax.f32 %v1039, 0.0
    %v1094 = vmax.f32 %v1080, 0.0
    %v1095 = vmax.f32 %v1082, 0.0
    %v1096 = vmax.f32 %v955, 0.0
    %v1097 = vmax.f32 %v957, 0.0
    %v1098 = vmax.f32 %v998, 0.0
    %v1099 = vmax.f32 %v1000, 0.0
    %v1100 = vmax.f32 %v1041, 0.0
    %v1101 = vmax.f32 %v1043, 0.0
    %v1102 = vmax.f32 %v1084, 0.0
    %v1103 = vmax.f32 %v1086, 0.0
    %v1104 = vpack.c.bf16 %v1096, %v1088
    %v1105 = vpack.c.bf16 %v1097, %v1089
    %v1106 = vpack.c.bf16 %v1098, %v1090
    %v1107 = vpack.c.bf16 %v1099, %v1091
    %v1108 = vpack.c.bf16 %v1100, %v1092
    %v1109 = vpack.c.bf16 %v1101, %v1093
    %v1110 = vpack.c.bf16 %v1102, %v1094
    %v1111 = vpack.c.bf16 %v1103, %v1095
    %v1112 = vld [vmem:[#allocation8] sm:$0xf]
    %v1113 = vld [vmem:[#allocation8 + $0x4] sm:$0xf]
    %v1114 = vld [vmem:[#allocation8 + $0x8] sm:$0xf]
    %v1115 = vld [vmem:[#allocation8 + $0xc] sm:$0xf]
    %v1116 = vld [vmem:[#allocation8 + $0x10] sm:$0xf]
    %v1117 = vld [vmem:[#allocation8 + $0x14] sm:$0xf]
    %v1118 = vld [vmem:[#allocation8 + $0x18] sm:$0xf]
    %v1119 = vld [vmem:[#allocation8 + $0x1c] sm:$0xf]
    %v1120 = vld [vmem:[#allocation8 + $0x20] sm:$0xf]
    %v1121 = vld [vmem:[#allocation8 + $0x24] sm:$0xf]
    %v1122 = vld [vmem:[#allocation8 + $0x28] sm:$0xf]
    %v1123 = vld [vmem:[#allocation8 + $0x2c] sm:$0xf]
    %v1124 = vld [vmem:[#allocation8 + $0x30] sm:$0xf]
    %v1125 = vld [vmem:[#allocation8 + $0x34] sm:$0xf]
    %v1126 = vld [vmem:[#allocation8 + $0x38] sm:$0xf]
    %v1127 = vld [vmem:[#allocation8 + $0x3c] sm:$0xf]
    %v1128 = vld [vmem:[#allocation8 + $0x40] sm:$0xf]
    %v1129 = vld [vmem:[#allocation8 + $0x44] sm:$0xf]
    %v1130 = vld [vmem:[#allocation8 + $0x48] sm:$0xf]
    %v1131 = vld [vmem:[#allocation8 + $0x4c] sm:$0xf]
    %v1132 = vld [vmem:[#allocation8 + $0x50] sm:$0xf]
    %v1133 = vld [vmem:[#allocation8 + $0x54] sm:$0xf]
    %v1134 = vld [vmem:[#allocation8 + $0x58] sm:$0xf]
    %v1135 = vld [vmem:[#allocation8 + $0x5c] sm:$0xf]
    %v1136 = vld [vmem:[#allocation8 + $0x60] sm:$0xf]
    %v1137 = vld [vmem:[#allocation8 + $0x64] sm:$0xf]
    %v1138 = vld [vmem:[#allocation8 + $0x68] sm:$0xf]
    %v1139 = vld [vmem:[#allocation8 + $0x6c] sm:$0xf]
    %v1140 = vld [vmem:[#allocation8 + $0x70] sm:$0xf]
    %v1141 = vld [vmem:[#allocation8 + $0x74] sm:$0xf]
    %v1142 = vld [vmem:[#allocation8 + $0x78] sm:$0xf]
    %v1143 = vld [vmem:[#allocation8 + $0x7c] sm:$0xf]
    %v1144 = vld [vmem:[#allocation8 + $0x80] sm:$0xf]
    %v1145 = vld [vmem:[#allocation8 + $0x84] sm:$0xf]
    %v1146 = vld [vmem:[#allocation8 + $0x88] sm:$0xf]
    %v1147 = vld [vmem:[#allocation8 + $0x8c] sm:$0xf]
    %v1148 = vld [vmem:[#allocation8 + $0x90] sm:$0xf]
    %v1149 = vld [vmem:[#allocation8 + $0x94] sm:$0xf]
    %v1150 = vld [vmem:[#allocation8 + $0x98] sm:$0xf]
    %v1151 = vld [vmem:[#allocation8 + $0x9c] sm:$0xf]
    %v1152 = vld [vmem:[#allocation8 + $0xa0] sm:$0xf]
    %v1153 = vld [vmem:[#allocation8 + $0xa4] sm:$0xf]
    %v1154 = vld [vmem:[#allocation8 + $0xa8] sm:$0xf]
    %v1155 = vld [vmem:[#allocation8 + $0xac] sm:$0xf]
    %v1156 = vld [vmem:[#allocation8 + $0xb0] sm:$0xf]
    %v1157 = vld [vmem:[#allocation8 + $0xb4] sm:$0xf]
    %v1158 = vld [vmem:[#allocation8 + $0xb8] sm:$0xf]
    %v1159 = vld [vmem:[#allocation8 + $0xbc] sm:$0xf]
    %v1160 = vld [vmem:[#allocation8 + $0xc0] sm:$0xf]
    %v1161 = vld [vmem:[#allocation8 + $0xc4] sm:$0xf]
    %v1162 = vld [vmem:[#allocation8 + $0xc8] sm:$0xf]
    %v1163 = vld [vmem:[#allocation8 + $0xcc] sm:$0xf]
    %v1164 = vld [vmem:[#allocation8 + $0xd0] sm:$0xf]
    %v1165 = vld [vmem:[#allocation8 + $0xd4] sm:$0xf]
    %v1166 = vld [vmem:[#allocation8 + $0xd8] sm:$0xf]
    %v1167 = vld [vmem:[#allocation8 + $0xdc] sm:$0xf]
    %v1168 = vld [vmem:[#allocation8 + $0xe0] sm:$0xf]
    %v1169 = vld [vmem:[#allocation8 + $0xe4] sm:$0xf]
    %v1170 = vld [vmem:[#allocation8 + $0xe8] sm:$0xf]
    %v1171 = vld [vmem:[#allocation8 + $0xec] sm:$0xf]
    %v1172 = vld [vmem:[#allocation8 + $0xf0] sm:$0xf]
    %v1173 = vld [vmem:[#allocation8 + $0xf4] sm:$0xf]
    %v1174 = vld [vmem:[#allocation8 + $0xf8] sm:$0xf]
    %v1175 = vld [vmem:[#allocation8 + $0xfc] sm:$0xf]
    %v1176 = vld [vmem:[#allocation8 + $0x100] sm:$0xf]
    %v1177 = vld [vmem:[#allocation8 + $0x104] sm:$0xf]
    %v1178 = vld [vmem:[#allocation8 + $0x108] sm:$0xf]
    %v1179 = vld [vmem:[#allocation8 + $0x10c] sm:$0xf]
    %v1180 = vld [vmem:[#allocation8 + $0x110] sm:$0xf]
    %v1181 = vld [vmem:[#allocation8 + $0x114] sm:$0xf]
    %v1182 = vld [vmem:[#allocation8 + $0x118] sm:$0xf]
    %v1183 = vld [vmem:[#allocation8 + $0x11c] sm:$0xf]
    %v1184 = vld [vmem:[#allocation8 + $0x120] sm:$0xf]
    %v1185 = vld [vmem:[#allocation8 + $0x124] sm:$0xf]
    %v1186 = vld [vmem:[#allocation8 + $0x128] sm:$0xf]
    %v1187 = vld [vmem:[#allocation8 + $0x12c] sm:$0xf]
    %v1188 = vld [vmem:[#allocation8 + $0x130] sm:$0xf]
    %v1189 = vld [vmem:[#allocation8 + $0x134] sm:$0xf]
    %v1190 = vld [vmem:[#allocation8 + $0x138] sm:$0xf]
    %v1191 = vld [vmem:[#allocation8 + $0x13c] sm:$0xf]
    %v1192 = vld [vmem:[#allocation8 + $0x140] sm:$0xf]
    %v1193 = vld [vmem:[#allocation8 + $0x144] sm:$0xf]
    %v1194 = vld [vmem:[#allocation8 + $0x148] sm:$0xf]
    %v1195 = vld [vmem:[#allocation8 + $0x14c] sm:$0xf]
    %v1196 = vld [vmem:[#allocation8 + $0x150] sm:$0xf]
    %v1197 = vld [vmem:[#allocation8 + $0x154] sm:$0xf]
    %v1198 = vld [vmem:[#allocation8 + $0x158] sm:$0xf]
    %v1199 = vld [vmem:[#allocation8 + $0x15c] sm:$0xf]
    %v1200 = vld [vmem:[#allocation8 + $0x160] sm:$0xf]
    %v1201 = vld [vmem:[#allocation8 + $0x164] sm:$0xf]
    %v1202 = vld [vmem:[#allocation8 + $0x168] sm:$0xf]
    %v1203 = vld [vmem:[#allocation8 + $0x16c] sm:$0xf]
    %v1204 = vld [vmem:[#allocation8 + $0x170] sm:$0xf]
    %v1205 = vld [vmem:[#allocation8 + $0x174] sm:$0xf]
    %v1206 = vld [vmem:[#allocation8 + $0x178] sm:$0xf]
    %v1207 = vld [vmem:[#allocation8 + $0x17c] sm:$0xf]
    %v1208 = vld [vmem:[#allocation8 + $0x180] sm:$0xf]
    %v1209 = vld [vmem:[#allocation8 + $0x184] sm:$0xf]
    %v1210 = vld [vmem:[#allocation8 + $0x188] sm:$0xf]
    %v1211 = vld [vmem:[#allocation8 + $0x18c] sm:$0xf]
    %v1212 = vld [vmem:[#allocation8 + $0x190] sm:$0xf]
    %v1213 = vld [vmem:[#allocation8 + $0x194] sm:$0xf]
    %v1214 = vld [vmem:[#allocation8 + $0x198] sm:$0xf]
    %v1215 = vld [vmem:[#allocation8 + $0x19c] sm:$0xf]
    %v1216 = vld [vmem:[#allocation8 + $0x1a0] sm:$0xf]
    %v1217 = vld [vmem:[#allocation8 + $0x1a4] sm:$0xf]
    %v1218 = vld [vmem:[#allocation8 + $0x1a8] sm:$0xf]
    %v1219 = vld [vmem:[#allocation8 + $0x1ac] sm:$0xf]
    %v1220 = vld [vmem:[#allocation8 + $0x1b0] sm:$0xf]
    %v1221 = vld [vmem:[#allocation8 + $0x1b4] sm:$0xf]
    %v1222 = vld [vmem:[#allocation8 + $0x1b8] sm:$0xf]
    %v1223 = vld [vmem:[#allocation8 + $0x1bc] sm:$0xf]
    %v1224 = vld [vmem:[#allocation8 + $0x1c0] sm:$0xf]
    %v1225 = vld [vmem:[#allocation8 + $0x1c4] sm:$0xf]
    %v1226 = vld [vmem:[#allocation8 + $0x1c8] sm:$0xf]
    %v1227 = vld [vmem:[#allocation8 + $0x1cc] sm:$0xf]
    %v1228 = vld [vmem:[#allocation8 + $0x1d0] sm:$0xf]
    %v1229 = vld [vmem:[#allocation8 + $0x1d4] sm:$0xf]
    %v1230 = vld [vmem:[#allocation8 + $0x1d8] sm:$0xf]
    %v1231 = vld [vmem:[#allocation8 + $0x1dc] sm:$0xf]
    %v1232 = vld [vmem:[#allocation8 + $0x1e0] sm:$0xf]
    %v1233 = vld [vmem:[#allocation8 + $0x1e4] sm:$0xf]
    %v1234 = vld [vmem:[#allocation8 + $0x1e8] sm:$0xf]
    %v1235 = vld [vmem:[#allocation8 + $0x1ec] sm:$0xf]
    %v1236 = vld [vmem:[#allocation8 + $0x1f0] sm:$0xf]
    %v1237 = vld [vmem:[#allocation8 + $0x1f4] sm:$0xf]
    %v1238 = vld [vmem:[#allocation8 + $0x1f8] sm:$0xf]
    %v1239 = vld [vmem:[#allocation8 + $0x1fc] sm:$0xf]
    %v1240 = vld [vmem:[%s4] sm:$0x1]
    %v1242 = vlaneseq
    %v1243 = vshrl.u32 %v1242, 7
    %v1244 = vsub.s32 0, %v1243
    %v1245 = vrot.slane %v1240, %v1244
    %v1375 = vunpack.c.l.b16 %v1112
    %v1376 = vunpack.c.l.b16 %v1113
    %v1377 = vunpack.c.l.b16 %v1114
    %v1378 = vunpack.c.l.b16 %v1115
    %v1379 = vunpack.c.l.b16 %v1116
    %v1380 = vunpack.c.l.b16 %v1117
    %v1381 = vunpack.c.l.b16 %v1118
    %v1382 = vunpack.c.l.b16 %v1119
    %v1383 = vunpack.c.l.b16 %v1120
    %v1384 = vunpack.c.l.b16 %v1121
    %v1385 = vunpack.c.l.b16 %v1122
    %v1386 = vunpack.c.l.b16 %v1123
    %v1387 = vunpack.c.l.b16 %v1124
    %v1388 = vunpack.c.l.b16 %v1125
    %v1389 = vunpack.c.l.b16 %v1126
    %v1390 = vunpack.c.l.b16 %v1127
    %v1391 = vunpack.c.l.b16 %v1128
    %v1392 = vunpack.c.l.b16 %v1129
    %v1393 = vunpack.c.l.b16 %v1130
    %v1394 = vunpack.c.l.b16 %v1131
    %v1395 = vunpack.c.l.b16 %v1132
    %v1396 = vunpack.c.l.b16 %v1133
    %v1397 = vunpack.c.l.b16 %v1134
    %v1398 = vunpack.c.l.b16 %v1135
    %v1399 = vunpack.c.l.b16 %v1136
    %v1400 = vunpack.c.l.b16 %v1137
    %v1401 = vunpack.c.l.b16 %v1138
    %v1402 = vunpack.c.l.b16 %v1139
    %v1403 = vunpack.c.l.b16 %v1140
    %v1404 = vunpack.c.l.b16 %v1141
    %v1405 = vunpack.c.l.b16 %v1142
    %v1406 = vunpack.c.l.b16 %v1143
    %v1407 = vunpack.c.l.b16 %v1144
    %v1408 = vunpack.c.l.b16 %v1145
    %v1409 = vunpack.c.l.b16 %v1146
    %v1410 = vunpack.c.l.b16 %v1147
    %v1411 = vunpack.c.l.b16 %v1148
    %v1412 = vunpack.c.l.b16 %v1149
    %v1413 = vunpack.c.l.b16 %v1150
    %v1414 = vunpack.c.l.b16 %v1151
    %v1415 = vunpack.c.l.b16 %v1152
    %v1416 = vunpack.c.l.b16 %v1153
    %v1417 = vunpack.c.l.b16 %v1154
    %v1418 = vunpack.c.l.b16 %v1155
    %v1419 = vunpack.c.l.b16 %v1156
    %v1420 = vunpack.c.l.b16 %v1157
    %v1421 = vunpack.c.l.b16 %v1158
    %v1422 = vunpack.c.l.b16 %v1159
    %v1423 = vunpack.c.l.b16 %v1160
    %v1424 = vunpack.c.l.b16 %v1161
    %v1425 = vunpack.c.l.b16 %v1162
    %v1426 = vunpack.c.l.b16 %v1163
    %v1427 = vunpack.c.l.b16 %v1164
    %v1428 = vunpack.c.l.b16 %v1165
    %v1429 = vunpack.c.l.b16 %v1166
    %v1430 = vunpack.c.l.b16 %v1167
    %v1431 = vunpack.c.l.b16 %v1168
    %v1432 = vunpack.c.l.b16 %v1169
    %v1433 = vunpack.c.l.b16 %v1170
    %v1434 = vunpack.c.l.b16 %v1171
    %v1435 = vunpack.c.l.b16 %v1172
    %v1436 = vunpack.c.l.b16 %v1173
    %v1437 = vunpack.c.l.b16 %v1174
    %v1438 = vunpack.c.l.b16 %v1175
    %v1439 = vunpack.c.l.b16 %v1176
    %v1440 = vunpack.c.l.b16 %v1177
    %v1441 = vunpack.c.l.b16 %v1178
    %v1442 = vunpack.c.l.b16 %v1179
    %v1443 = vunpack.c.l.b16 %v1180
    %v1444 = vunpack.c.l.b16 %v1181
    %v1445 = vunpack.c.l.b16 %v1182
    %v1446 = vunpack.c.l.b16 %v1183
    %v1447 = vunpack.c.l.b16 %v1184
    %v1448 = vunpack.c.l.b16 %v1185
    %v1449 = vunpack.c.l.b16 %v1186
    %v1450 = vunpack.c.l.b16 %v1187
    %v1451 = vunpack.c.l.b16 %v1188
    %v1452 = vunpack.c.l.b16 %v1189
    %v1453 = vunpack.c.l.b16 %v1190
    %v1454 = vunpack.c.l.b16 %v1191
    %v1455 = vunpack.c.l.b16 %v1192
    %v1456 = vunpack.c.l.b16 %v1193
    %v1457 = vunpack.c.l.b16 %v1194
    %v1458 = vunpack.c.l.b16 %v1195
    %v1459 = vunpack.c.l.b16 %v1196
    %v1460 = vunpack.c.l.b16 %v1197
    %v1461 = vunpack.c.l.b16 %v1198
    %v1462 = vunpack.c.l.b16 %v1199
    %v1463 = vunpack.c.l.b16 %v1200
    %v1464 = vunpack.c.l.b16 %v1201
    %v1465 = vunpack.c.l.b16 %v1202
    %v1466 = vunpack.c.l.b16 %v1203
    %v1467 = vunpack.c.l.b16 %v1204
    %v1468 = vunpack.c.l.b16 %v1205
    %v1469 = vunpack.c.l.b16 %v1206
    %v1470 = vunpack.c.l.b16 %v1207
    %v1471 = vunpack.c.l.b16 %v1208
    %v1472 = vunpack.c.l.b16 %v1209
    %v1473 = vunpack.c.l.b16 %v1210
    %v1474 = vunpack.c.l.b16 %v1211
    %v1475 = vunpack.c.l.b16 %v1212
    %v1476 = vunpack.c.l.b16 %v1213
    %v1477 = vunpack.c.l.b16 %v1214
    %v1478 = vunpack.c.l.b16 %v1215
    %v1479 = vunpack.c.l.b16 %v1216
    %v1480 = vunpack.c.l.b16 %v1217
    %v1481 = vunpack.c.l.b16 %v1218
    %v1482 = vunpack.c.l.b16 %v1219
    %v1483 = vunpack.c.l.b16 %v1220
    %v1484 = vunpack.c.l.b16 %v1221
    %v1485 = vunpack.c.l.b16 %v1222
    %v1486 = vunpack.c.l.b16 %v1223
    %v1487 = vunpack.c.l.b16 %v1224
    %v1488 = vunpack.c.l.b16 %v1225
    %v1489 = vunpack.c.l.b16 %v1226
    %v1490 = vunpack.c.l.b16 %v1227
    %v1491 = vunpack.c.l.b16 %v1228
    %v1492 = vunpack.c.l.b16 %v1229
    %v1493 = vunpack.c.l.b16 %v1230
    %v1494 = vunpack.c.l.b16 %v1231
    %v1495 = vunpack.c.l.b16 %v1232
    %v1496 = vunpack.c.l.b16 %v1233
    %v1497 = vunpack.c.l.b16 %v1234
    %v1498 = vunpack.c.l.b16 %v1235
    %v1499 = vunpack.c.l.b16 %v1236
    %v1500 = vunpack.c.l.b16 %v1237
    %v1501 = vunpack.c.l.b16 %v1238
    %v1502 = vunpack.c.l.b16 %v1239
    %v1503 = vpack.c.b16 %v1376, %v1375
    %v1504 = vpack.c.b16 %v1378, %v1377
    %v1505 = vpack.c.b16 %v1380, %v1379
    %v1506 = vpack.c.b16 %v1382, %v1381
    %v1507 = vpack.c.b16 %v1384, %v1383
    %v1508 = vpack.c.b16 %v1386, %v1385
    %v1509 = vpack.c.b16 %v1388, %v1387
    %v1510 = vpack.c.b16 %v1390, %v1389
    %v1511 = vpack.c.b16 %v1392, %v1391
    %v1512 = vpack.c.b16 %v1394, %v1393
    %v1513 = vpack.c.b16 %v1396, %v1395
    %v1514 = vpack.c.b16 %v1398, %v1397
    %v1515 = vpack.c.b16 %v1400, %v1399
    %v1516 = vpack.c.b16 %v1402, %v1401
    %v1517 = vpack.c.b16 %v1404, %v1403
    %v1518 = vpack.c.b16 %v1406, %v1405
    %v1519 = vpack.c.b16 %v1408, %v1407
    %v1520 = vpack.c.b16 %v1410, %v1409
    %v1521 = vpack.c.b16 %v1412, %v1411
    %v1522 = vpack.c.b16 %v1414, %v1413
    %v1523 = vpack.c.b16 %v1416, %v1415
    %v1524 = vpack.c.b16 %v1418, %v1417
    %v1525 = vpack.c.b16 %v1420, %v1419
    %v1526 = vpack.c.b16 %v1422, %v1421
    %v1527 = vpack.c.b16 %v1424, %v1423
    %v1528 = vpack.c.b16 %v1426, %v1425
    %v1529 = vpack.c.b16 %v1428, %v1427
    %v1530 = vpack.c.b16 %v1430, %v1429
    %v1531 = vpack.c.b16 %v1432, %v1431
    %v1532 = vpack.c.b16 %v1434, %v1433
    %v1533 = vpack.c.b16 %v1436, %v1435
    %v1534 = vpack.c.b16 %v1438, %v1437
    %v1535 = vpack.c.b16 %v1440, %v1439
    %v1536 = vpack.c.b16 %v1442, %v1441
    %v1537 = vpack.c.b16 %v1444, %v1443
    %v1538 = vpack.c.b16 %v1446, %v1445
    %v1539 = vpack.c.b16 %v1448, %v1447
    %v1540 = vpack.c.b16 %v1450, %v1449
    %v1541 = vpack.c.b16 %v1452, %v1451
    %v1542 = vpack.c.b16 %v1454, %v1453
    %v1543 = vpack.c.b16 %v1456, %v1455
    %v1544 = vpack.c.b16 %v1458, %v1457
    %v1545 = vpack.c.b16 %v1460, %v1459
    %v1546 = vpack.c.b16 %v1462, %v1461
    %v1547 = vpack.c.b16 %v1464, %v1463
    %v1548 = vpack.c.b16 %v1466, %v1465
    %v1549 = vpack.c.b16 %v1468, %v1467
    %v1550 = vpack.c.b16 %v1470, %v1469
    %v1551 = vpack.c.b16 %v1472, %v1471
    %v1552 = vpack.c.b16 %v1474, %v1473
    %v1553 = vpack.c.b16 %v1476, %v1475
    %v1554 = vpack.c.b16 %v1478, %v1477
    %v1555 = vpack.c.b16 %v1480, %v1479
    %v1556 = vpack.c.b16 %v1482, %v1481
    %v1557 = vpack.c.b16 %v1484, %v1483
    %v1558 = vpack.c.b16 %v1486, %v1485
    %v1559 = vpack.c.b16 %v1488, %v1487
    %v1560 = vpack.c.b16 %v1490, %v1489
    %v1561 = vpack.c.b16 %v1492, %v1491
    %v1562 = vpack.c.b16 %v1494, %v1493
    %v1563 = vpack.c.b16 %v1496, %v1495
    %v1564 = vpack.c.b16 %v1498, %v1497
    %v1565 = vpack.c.b16 %v1500, %v1499
    %v1566 = vpack.c.b16 %v1502, %v1501
    %1631 = vmatprep.subr.bf16.mxu0 0
    %1632 = vmatpush1.bf16.msra.mxu0 %v1503
    %1633 = vmatprep.subr.bf16.mxu0 0
    %1634 = vmatpush1.bf16.msra.mxu0 %v1504
    %1635 = vmatprep.subr.bf16.mxu0 0
    %1636 = vmatpush1.bf16.msra.mxu0 %v1505
    %1637 = vmatprep.subr.bf16.mxu0 0
    %1638 = vmatpush1.bf16.msra.mxu0 %v1506
    %1639 = vmatprep.subr.bf16.mxu0 0
    %1640 = vmatpush1.bf16.msra.mxu0 %v1507
    %1641 = vmatprep.subr.bf16.mxu0 0
    %1642 = vmatpush1.bf16.msra.mxu0 %v1508
    %1643 = vmatprep.subr.bf16.mxu0 0
    %1644 = vmatpush1.bf16.msra.mxu0 %v1509
    %1645 = vmatprep.subr.bf16.mxu0 0
    %1646 = vmatpush1.bf16.msra.mxu0 %v1510
    %1647 = vmatprep.subr.bf16.mxu0 0
    %1648 = vmatpush1.bf16.msra.mxu0 %v1511
    %1649 = vmatprep.subr.bf16.mxu0 0
    %1650 = vmatpush1.bf16.msra.mxu0 %v1512
    %1651 = vmatprep.subr.bf16.mxu0 0
    %1652 = vmatpush1.bf16.msra.mxu0 %v1513
    %1653 = vmatprep.subr.bf16.mxu0 0
    %1654 = vmatpush1.bf16.msra.mxu0 %v1514
    %1655 = vmatprep.subr.bf16.mxu0 0
    %1656 = vmatpush1.bf16.msra.mxu0 %v1515
    %1657 = vmatprep.subr.bf16.mxu0 0
    %1658 = vmatpush1.bf16.msra.mxu0 %v1516
    %1659 = vmatprep.subr.bf16.mxu0 0
    %1660 = vmatpush1.bf16.msra.mxu0 %v1517
    %1661 = vmatprep.subr.bf16.mxu0 0
    %1662 = vmatpush1.bf16.msra.mxu0 %v1518
    %1663 = vmatprep.mubr.bf16.mxu0 %v1105
    %1664 = vmatmul.mubr.bf16.gmra.mrb[0].mxu0 %v1104
    %v1665 = vpop.f32.mrb[0].mxu0
    %v1666 = vadd.f32 %v1245, %v1665
    %v1667 = vpop.f32.mrb[0].mxu0
    %v1668 = vpop.f32.mrb[0].mxu0
    %v1669 = vadd.f32 %v1245, %v1668
    %v1670 = vpop.f32.mrb[0].mxu0
    %1671 = vdwg.mxu0
    %1672 = vmatprep.subr.bf16.mxu0 0
    %1673 = vmatpush1.bf16.msra.mxu0 %v1519
    %1674 = vmatprep.subr.bf16.mxu0 0
    %1675 = vmatpush1.bf16.msra.mxu0 %v1520
    %1676 = vmatprep.subr.bf16.mxu0 0
    %1677 = vmatpush1.bf16.msra.mxu0 %v1521
    %1678 = vmatprep.subr.bf16.mxu0 0
    %1679 = vmatpush1.bf16.msra.mxu0 %v1522
    %1680 = vmatprep.subr.bf16.mxu0 0
    %1681 = vmatpush1.bf16.msra.mxu0 %v1523
    %1682 = vmatprep.subr.bf16.mxu0 0
    %1683 = vmatpush1.bf16.msra.mxu0 %v1524
    %1684 = vmatprep.subr.bf16.mxu0 0
    %1685 = vmatpush1.bf16.msra.mxu0 %v1525
    %1686 = vmatprep.subr.bf16.mxu0 0
    %1687 = vmatpush1.bf16.msra.mxu0 %v1526
    %1688 = vmatprep.subr.bf16.mxu0 0
    %1689 = vmatpush1.bf16.msra.mxu0 %v1527
    %1690 = vmatprep.subr.bf16.mxu0 0
    %1691 = vmatpush1.bf16.msra.mxu0 %v1528
    %1692 = vmatprep.subr.bf16.mxu0 0
    %1693 = vmatpush1.bf16.msra.mxu0 %v1529
    %1694 = vmatprep.subr.bf16.mxu0 0
    %1695 = vmatpush1.bf16.msra.mxu0 %v1530
    %1696 = vmatprep.subr.bf16.mxu0 0
    %1697 = vmatpush1.bf16.msra.mxu0 %v1531
    %1698 = vmatprep.subr.bf16.mxu0 0
    %1699 = vmatpush1.bf16.msra.mxu0 %v1532
    %1700 = vmatprep.subr.bf16.mxu0 0
    %1701 = vmatpush1.bf16.msra.mxu0 %v1533
    %1702 = vmatprep.subr.bf16.mxu0 0
    %1703 = vmatpush1.bf16.msra.mxu0 %v1534
    %1704 = vmatprep.mubr.bf16.mxu0 %v1107
    %1705 = vmatmul.mubr.bf16.gmra.mrb[0].mxu0 %v1106
    %v1706 = vpop.f32.mrb[0].mxu0
    %v1707 = vadd.f32 %v1666, %v1706
    %v1708 = vpop.f32.mrb[0].mxu0
    %v1709 = vpop.f32.mrb[0].mxu0
    %v1710 = vadd.f32 %v1669, %v1709
    %v1711 = vpop.f32.mrb[0].mxu0
    %1712 = vdwg.mxu0
    %1713 = vmatprep.subr.bf16.mxu0 0
    %1714 = vmatpush1.bf16.msra.mxu0 %v1535
    %1715 = vmatprep.subr.bf16.mxu0 0
    %1716 = vmatpush1.bf16.msra.mxu0 %v1536
    %1717 = vmatprep.subr.bf16.mxu0 0
    %1718 = vmatpush1.bf16.msra.mxu0 %v1537
    %1719 = vmatprep.subr.bf16.mxu0 0
    %1720 = vmatpush1.bf16.msra.mxu0 %v1538
    %1721 = vmatprep.subr.bf16.mxu0 0
    %1722 = vmatpush1.bf16.msra.mxu0 %v1539
    %1723 = vmatprep.subr.bf16.mxu0 0
    %1724 = vmatpush1.bf16.msra.mxu0 %v1540
    %1725 = vmatprep.subr.bf16.mxu0 0
    %1726 = vmatpush1.bf16.msra.mxu0 %v1541
    %1727 = vmatprep.subr.bf16.mxu0 0
    %1728 = vmatpush1.bf16.msra.mxu0 %v1542
    %1729 = vmatprep.subr.bf16.mxu0 0
    %1730 = vmatpush1.bf16.msra.mxu0 %v1543
    %1731 = vmatprep.subr.bf16.mxu0 0
    %1732 = vmatpush1.bf16.msra.mxu0 %v1544
    %1733 = vmatprep.subr.bf16.mxu0 0
    %1734 = vmatpush1.bf16.msra.mxu0 %v1545
    %1735 = vmatprep.subr.bf16.mxu0 0
    %1736 = vmatpush1.bf16.msra.mxu0 %v1546
    %1737 = vmatprep.subr.bf16.mxu0 0
    %1738 = vmatpush1.bf16.msra.mxu0 %v1547
    %1739 = vmatprep.subr.bf16.mxu0 0
    %1740 = vmatpush1.bf16.msra.mxu0 %v1548
    %1741 = vmatprep.subr.bf16.mxu0 0
    %1742 = vmatpush1.bf16.msra.mxu0 %v1549
    %1743 = vmatprep.subr.bf16.mxu0 0
    %1744 = vmatpush1.bf16.msra.mxu0 %v1550
    %1745 = vmatprep.mubr.bf16.mxu0 %v1109
    %1746 = vmatmul.mubr.bf16.gmra.mrb[0].mxu0 %v1108
    %v1747 = vpop.f32.mrb[0].mxu0
    %v1748 = vadd.f32 %v1707, %v1747
    %v1749 = vpop.f32.mrb[0].mxu0
    %v1750 = vpop.f32.mrb[0].mxu0
    %v1751 = vadd.f32 %v1710, %v1750
    %v1752 = vpop.f32.mrb[0].mxu0
    %1753 = vdwg.mxu0
    %1754 = vmatprep.subr.bf16.mxu0 0
    %1755 = vmatpush1.bf16.msra.mxu0 %v1551
    %1756 = vmatprep.subr.bf16.mxu0 0
    %1757 = vmatpush1.bf16.msra.mxu0 %v1552
    %1758 = vmatprep.subr.bf16.mxu0 0
    %1759 = vmatpush1.bf16.msra.mxu0 %v1553
    %1760 = vmatprep.subr.bf16.mxu0 0
    %1761 = vmatpush1.bf16.msra.mxu0 %v1554
    %1762 = vmatprep.subr.bf16.mxu0 0
    %1763 = vmatpush1.bf16.msra.mxu0 %v1555
    %1764 = vmatprep.subr.bf16.mxu0 0
    %1765 = vmatpush1.bf16.msra.mxu0 %v1556
    %1766 = vmatprep.subr.bf16.mxu0 0
    %1767 = vmatpush1.bf16.msra.mxu0 %v1557
    %1768 = vmatprep.subr.bf16.mxu0 0
    %1769 = vmatpush1.bf16.msra.mxu0 %v1558
    %1770 = vmatprep.subr.bf16.mxu0 0
    %1771 = vmatpush1.bf16.msra.mxu0 %v1559
    %1772 = vmatprep.subr.bf16.mxu0 0
    %1773 = vmatpush1.bf16.msra.mxu0 %v1560
    %1774 = vmatprep.subr.bf16.mxu0 0
    %1775 = vmatpush1.bf16.msra.mxu0 %v1561
    %1776 = vmatprep.subr.bf16.mxu0 0
    %1777 = vmatpush1.bf16.msra.mxu0 %v1562
    %1778 = vmatprep.subr.bf16.mxu0 0
    %1779 = vmatpush1.bf16.msra.mxu0 %v1563
    %1780 = vmatprep.subr.bf16.mxu0 0
    %1781 = vmatpush1.bf16.msra.mxu0 %v1564
    %1782 = vmatprep.subr.bf16.mxu0 0
    %1783 = vmatpush1.bf16.msra.mxu0 %v1565
    %1784 = vmatprep.subr.bf16.mxu0 0
    %1785 = vmatpush1.bf16.msra.mxu0 %v1566
    %1786 = vmatprep.mubr.bf16.mxu0 %v1111
    %1787 = vmatmul.mubr.bf16.gmra.mrb[0].mxu0 %v1110
    %v1788 = vpop.f32.mrb[0].mxu0
    %v1789 = vadd.f32 %v1748, %v1788
    %v1790 = vpop.f32.mrb[0].mxu0
    %v1791 = vpop.f32.mrb[0].mxu0
    %v1792 = vadd.f32 %v1751, %v1791
    %v1793 = vpop.f32.mrb[0].mxu0
    %1794 = vdwg.mxu0
    %v1795 = vmax.f32 %v1789, 0.0
    %v1796 = vmax.f32 %v1792, 0.0
    %v1797 = vpack.c.bf16 %v1796, %v1795
    %v1798 = vld [vmem:[#allocation10] sm:$0xf]
    %v1799 = vld [vmem:[#allocation10 + $0x4] sm:$0xf]
    %v1800 = vld [vmem:[#allocation10 + $0x8] sm:$0xf]
    %v1801 = vld [vmem:[#allocation10 + $0xc] sm:$0xf]
    %v1802 = vld [vmem:[#allocation10 + $0x10] sm:$0xf]
    %v1803 = vld [vmem:[#allocation10 + $0x14] sm:$0xf]
    %v1804 = vld [vmem:[#allocation10 + $0x18] sm:$0xf]
    %v1805 = vld [vmem:[#allocation10 + $0x1c] sm:$0xf]
    %v1806 = vld [vmem:[#allocation10 + $0x20] sm:$0xf]
    %v1807 = vld [vmem:[#allocation10 + $0x24] sm:$0xf]
    %v1808 = vld [vmem:[#allocation10 + $0x28] sm:$0xf]
    %v1809 = vld [vmem:[#allocation10 + $0x2c] sm:$0xf]
    %v1810 = vld [vmem:[#allocation10 + $0x30] sm:$0xf]
    %v1811 = vld [vmem:[#allocation10 + $0x34] sm:$0xf]
    %v1812 = vld [vmem:[#allocation10 + $0x38] sm:$0xf]
    %v1813 = vld [vmem:[#allocation10 + $0x3c] sm:$0xf]
    %v1814 = vld [vmem:[%s6] sm:$0x1]
    %v1816 = vlaneseq
    %v1817 = vshrl.u32 %v1816, 7
    %v1818 = vsub.s32 0, %v1817
    %v1819 = vrot.slane %v1814, %v1818
    %v1837 = vunpack.c.l.b16 %v1798
    %v1838 = vunpack.c.l.b16 %v1799
    %v1839 = vunpack.c.l.b16 %v1800
    %v1840 = vunpack.c.l.b16 %v1801
    %v1841 = vunpack.c.l.b16 %v1802
    %v1842 = vunpack.c.l.b16 %v1803
    %v1843 = vunpack.c.l.b16 %v1804
    %v1844 = vunpack.c.l.b16 %v1805
    %v1845 = vunpack.c.l.b16 %v1806
    %v1846 = vunpack.c.l.b16 %v1807
    %v1847 = vunpack.c.l.b16 %v1808
    %v1848 = vunpack.c.l.b16 %v1809
    %v1849 = vunpack.c.l.b16 %v1810
    %v1850 = vunpack.c.l.b16 %v1811
    %v1851 = vunpack.c.l.b16 %v1812
    %v1852 = vunpack.c.l.b16 %v1813
    %v1853 = vpack.c.b16 %v1838, %v1837
    %v1854 = vpack.c.b16 %v1840, %v1839
    %v1855 = vpack.c.b16 %v1842, %v1841
    %v1856 = vpack.c.b16 %v1844, %v1843
    %v1857 = vpack.c.b16 %v1846, %v1845
    %v1858 = vpack.c.b16 %v1848, %v1847
    %v1859 = vpack.c.b16 %v1850, %v1849
    %v1860 = vpack.c.b16 %v1852, %v1851
    %1869 = vmatprep.subr.bf16.mxu0 0
    %1870 = vmatpush1.bf16.msra.mxu0 %v1853
    %1871 = vmatprep.subr.bf16.mxu0 0
    %1872 = vmatpush1.bf16.msra.mxu0 %v1854
    %1873 = vmatprep.subr.bf16.mxu0 0
    %1874 = vmatpush1.bf16.msra.mxu0 %v1855
    %1875 = vmatprep.subr.bf16.mxu0 0
    %1876 = vmatpush1.bf16.msra.mxu0 %v1856
    %1877 = vmatprep.subr.bf16.mxu0 0
    %1878 = vmatpush1.bf16.msra.mxu0 %v1857
    %1879 = vmatprep.subr.bf16.mxu0 0
    %1880 = vmatpush1.bf16.msra.mxu0 %v1858
    %1881 = vmatprep.subr.bf16.mxu0 0
    %1882 = vmatpush1.bf16.msra.mxu0 %v1859
    %1883 = vmatprep.subr.bf16.mxu0 0
    %1884 = vmatpush1.bf16.msra.mxu0 %v1860
    %1885 = vmatprep.subr.bf16.mxu0 0
    %1886 = vmatpush1.bf16.msra.mxu0 0
    %1887 = vmatprep.subr.bf16.mxu0 0
    %1888 = vmatpush1.bf16.msra.mxu0 0
    %1889 = vmatprep.subr.bf16.mxu0 0
    %1890 = vmatpush1.bf16.msra.mxu0 0
    %1891 = vmatprep.subr.bf16.mxu0 0
    %1892 = vmatpush1.bf16.msra.mxu0 0
    %1893 = vmatprep.subr.bf16.mxu0 0
    %1894 = vmatpush1.bf16.msra.mxu0 0
    %1895 = vmatprep.subr.bf16.mxu0 0
    %1896 = vmatpush1.bf16.msra.mxu0 0
    %1897 = vmatprep.subr.bf16.mxu0 0
    %1898 = vmatpush1.bf16.msra.mxu0 0
    %1899 = vmatprep.subr.bf16.mxu0 0
    %1900 = vmatpush1.bf16.msra.mxu0 0
    %1901 = vmatprep.mubr.bf16.mxu0 0
    %1902 = vmatmul.mubr.bf16.gmra.mrb[0].mxu0 %v1797
    %v1903 = vpop.f32.mrb[0].mxu0
    %v1904 = vadd.f32 %v1819, %v1903
    %v1905 = vpop.f32.mrb[0].mxu0
    %v1906 = vpop.f32.mrb[0].mxu0
    %v1907 = vadd.f32 %v1819, %v1906
    %v1908 = vpop.f32.mrb[0].mxu0
    %1909 = vdwg.mxu0
    %1910 = vst [vmem:[#allocation11] sm:$0xff] %v1904
    %1911 = vst [vmem:[#allocation11 + $0x8] sm:$0xff] %v1907
    // Predicated region
    $region50: #{tpu_custom_call.1} parent=1 // pred_check
      _
    $region51: #{tpu_custom_call.1} parent=1 // pred_check_branch
      %1913 = sbr.rel (0) target = $region53
    $region52: #{tpu_custom_call.1} parent=1 // pred_region
      %s1915 = ssub.s32 256, 256
      %1916 = vsyncadd [#allocation4], %s1915
      %s1917 = sshll.u32 [#allocation11], 4
      %s1918 = int_to_ptr.vmem [resolvable:$true] %s1917
      %1923 = dma.vmem_to_hbm [thread:$0]  %s1918, 256, %s7, [#allocation4], 128, 128, 8
    $region53: #{tpu_custom_call.1} parent=1 // pred_fallthru
      _
    // Predicated region
    $region54: #{tpu_custom_call.1} parent=1 // pred_check
      _
    $region55: #{tpu_custom_call.1} parent=1 // pred_check_branch
      %1925 = sbr.rel (0) target = $region57
    $region56: #{tpu_custom_call.1} parent=1 // pred_region
      %1926 = dma.done [#allocation4], 256
    $region57: #{tpu_custom_call.1} parent=1 // pred_fallthru
      _
    %1927 = vsyncpa [#allocation3], 1
    %1928 = vsyncpa [#allocation6], 1
    %1929 = vsyncpa [#allocation9], 1
    %1930 = vsyncpa [#allocation4], 1

</llo_original>
